<compile_context>
chip_gen: v7x
topology: tpu7x:2x2x1
jax: 0.10.0
libtpu: 0.0.40
codegen_flags: <defaults>
</compile_context>

<pallas_src>
import math
import jax
import jax.numpy as jnp
import numpy as np
from jax import lax
from jax.experimental import pallas as pl
from jax.experimental.pallas import tpu as pltpu

# small, module-consistent shapes
S, BS, FEAT = 8, 2, 16          # n_agents (seq), batch, feature_size
NINP, NHEAD, NHID, NLAYERS, OUT = 32, 2, 64, 2, 8
HD = NINP // NHEAD              # head dim
SCALE = 1.0 / math.sqrt(HD)     # q scaling inside nn.MultiheadAttention
SQRT_NINP = math.sqrt(NINP)
EPS = 1e-5                      # nn.LayerNorm default eps
NTOK = S * BS                   # all tokens of the whole batch in one tile


def _layernorm(v, g, b):
    mu = jnp.mean(v, axis=-1, keepdims=True)
    var = jnp.mean((v - mu) ** 2, axis=-1, keepdims=True)
    return (v - mu) * jax.lax.rsqrt(var + EPS) * g + b


def transformer_kernel(src_ref, w_enc_ref, wqkv_ref, wout_ref,
                       wff1_ref, wff2_ref, vec_ref, w_dec_ref, misc_ref,
                       out_ref):
    # token t = s*BS + b  (flattened seq-first layout, no transpose needed)
    src = src_ref[...]                                   # (NTOK, FEAT)

    misc = misc_ref[...]                                 # (2, 128)
    b_enc = misc[0:1, :NINP]                             # (1, NINP)
    b_dec = misc[1:2, :OUT]                              # (1, OUT)

    # encoder linear  +  * sqrt(ninp)
    x = (jnp.dot(src, w_enc_ref[...], preferred_element_type=jnp.float32)
         + b_enc) * SQRT_NINP                            # (NTOK, NINP)

    # block-diagonal attention mask: token t belongs to batch (t % BS);
    # cross-batch scores get -1e30 so one softmax tile covers the whole batch.
    row_b = jax.lax.broadcasted_iota(jnp.int32, (NTOK, NTOK), 0) % BS
    col_b = jax.lax.broadcasted_iota(jnp.int32, (NTOK, NTOK), 1) % BS
    neg_mask = jnp.where(row_b == col_b, 0.0, -1e30).astype(jnp.float32)

    # N stacked TransformerEncoderLayers (static unroll; params stacked on axis 0)
    for l in range(NLAYERS):
        vecs = vec_ref[l]                                # (8, 128) packed vectors
        in_b = vecs[0:1, :3 * NINP]
        out_b = vecs[1:2, :NINP]
        ff1_b = vecs[2:3, :NHID]
        ff2_b = vecs[3:4, :NINP]
        n1_g = vecs[4:5, :NINP]
        n1_b = vecs[5:6, :NINP]
        n2_g = vecs[6:7, :NINP]
        n2_b = vecs[7:8, :NINP]

        # --- multi-head self attention (whole batch at once) ---
        qkv = jnp.dot(x, wqkv_ref[l],
                      preferred_element_type=jnp.float32) + in_b   # (NTOK, 3E)
        q = qkv[:, :NINP] * SCALE
        k = qkv[:, NINP:2 * NINP]
        v = qkv[:, 2 * NINP:]
        heads = []
        for h in range(NHEAD):
            sl = slice(h * HD, (h + 1) * HD)
            scores = lax.dot_general(
                q[:, sl], k[:, sl], (((1,), (1,)), ((), ())),
                preferred_element_type=jnp.float32) + neg_mask     # (NTOK, NTOK)
            scores = scores - jnp.max(scores, axis=-1, keepdims=True)
            p = jnp.exp(scores)
            p = p * pl.reciprocal(jnp.sum(p, axis=-1, keepdims=True), approx=True)
            heads.append(jnp.dot(p, v[:, sl],
                                 preferred_element_type=jnp.float32))
        attn = jnp.concatenate(heads, axis=-1)                     # (NTOK, NINP)
        attn = jnp.dot(attn, wout_ref[l],
                       preferred_element_type=jnp.float32) + out_b

        # residual + layernorm 1
        x = _layernorm(x + attn, n1_g, n1_b)

        # --- feed-forward ---
        ff = jnp.maximum(
            jnp.dot(x, wff1_ref[l], preferred_element_type=jnp.float32)
            + ff1_b, 0.0)
        ff = jnp.dot(ff, wff2_ref[l],
                     preferred_element_type=jnp.float32) + ff2_b

        # residual + layernorm 2
        x = _layernorm(x + ff, n2_g, n2_b)

    # decoder on cat([output1, src], dim=-1): one matmul, PyTorch order
    dec = jnp.dot(jnp.concatenate([x, src], axis=-1), w_dec_ref[...],
                  preferred_element_type=jnp.float32) + b_dec
    out_ref[...] = jnp.tanh(dec)                         # used_by == 'policy'


def transformer_forward(src, q):
    """src: (S, BS, FEAT) seq-first, like PyTorch. Returns (S, BS, OUT)."""
    src2 = src.reshape(NTOK, FEAT)          # free: contiguous row-major reshape
    vmem = pltpu.MemorySpace.VMEM
    out = pl.pallas_call(
        transformer_kernel,
        out_shape=jax.ShapeDtypeStruct((NTOK, OUT), jnp.float32),
        in_specs=[pl.BlockSpec(memory_space=vmem)] * 9,
        out_specs=pl.BlockSpec(memory_space=vmem),
    )(src2, q['w_enc'], q['wqkv'], q['wout'], q['wff1'], q['wff2'],
      q['vec'], q['w_dec'], q['misc'])
    return out.reshape(S, BS, OUT)          # free reshape back to seq-first


def init_params(key):
    """PyTorch-layout parameters (weight = (out_features, in_features))."""
    ks = jax.random.split(key, 16)
    u = lambda k, shape: jax.random.uniform(k, shape, jnp.float32, -0.1, 0.1)
    return dict(
        w_enc=u(ks[0], (NINP, FEAT)),
        b_enc=u(ks[1], (1, NINP)),
        in_w=u(ks[2], (NLAYERS, 3 * NINP, NINP)),
        in_b=u(ks[3], (NLAYERS, 1, 3 * NINP)),
        out_w=u(ks[4], (NLAYERS, NINP, NINP)),
        out_b=u(ks[5], (NLAYERS, 1, NINP)),
        ff1_w=u(ks[6], (NLAYERS, NHID, NINP)),
        ff1_b=u(ks[7], (NLAYERS, 1, NHID)),
        ff2_w=u(ks[8], (NLAYERS, NINP, NHID)),
        ff2_b=u(ks[9], (NLAYERS, 1, NINP)),
        n1_g=1.0 + u(ks[10], (NLAYERS, 1, NINP)),
        n1_b=u(ks[11], (NLAYERS, 1, NINP)),
        n2_g=1.0 + u(ks[12], (NLAYERS, 1, NINP)),
        n2_b=u(ks[13], (NLAYERS, 1, NINP)),
        w_dec=u(ks[14], (OUT, NINP + FEAT)),
        b_dec=u(ks[15], (1, OUT)),
    )


def pack_params(p):
    """Kernel-layout params: weights pre-transposed to (in_dim, out_dim);
    per-layer bias/LN vectors packed into one (NLAYERS, 8, 128) slab and the
    enc/dec biases into one (2, 128) slab (fewer, larger DMAs)."""
    def pad_row(v):
        v = v.reshape(-1)
        return jnp.pad(v, (0, 128 - v.shape[0]))

    vec = jnp.stack([
        jnp.stack([pad_row(p['in_b'][l]), pad_row(p['out_b'][l]),
                   pad_row(p['ff1_b'][l]), pad_row(p['ff2_b'][l]),
                   pad_row(p['n1_g'][l]), pad_row(p['n1_b'][l]),
                   pad_row(p['n2_g'][l]), pad_row(p['n2_b'][l])], axis=0)
        for l in range(NLAYERS)], axis=0)                        # (L, 8, 128)
    misc = jnp.stack([pad_row(p['b_enc']), pad_row(p['b_dec'])], axis=0)  # (2, 128)

    return dict(
        w_enc=p['w_enc'].T,                                      # (FEAT, NINP)
        wqkv=jnp.transpose(p['in_w'], (0, 2, 1)),                # (L, NINP, 3E)
        wout=jnp.transpose(p['out_w'], (0, 2, 1)),               # (L, NINP, NINP)
        wff1=jnp.transpose(p['ff1_w'], (0, 2, 1)),               # (L, NINP, NHID)
        wff2=jnp.transpose(p['ff2_w'], (0, 2, 1)),               # (L, NHID, NINP)
        w_dec=p['w_dec'].T,                                      # (NINP+FEAT, OUT)
        vec=vec, misc=misc)


def reference_forward(src, p):
    """Pure-JAX reference matching the PyTorch forward (eval mode)."""
    def one(sb):                                                 # (S, FEAT)
        x = (sb @ p['w_enc'].T + p['b_enc']) * SQRT_NINP
        for l in range(NLAYERS):
            qkv = x @ p['in_w'][l].T + p['in_b'][l]
            q = qkv[:, :NINP] * SCALE
            k = qkv[:, NINP:2 * NINP]
            v = qkv[:, 2 * NINP:]
            heads = []
            for h in range(NHEAD):
                sl = slice(h * HD, (h + 1) * HD)
                pr = jax.nn.softmax(q[:, sl] @ k[:, sl].T, axis=-1)
                heads.append(pr @ v[:, sl])
            ao = jnp.concatenate(heads, axis=-1) @ p['out_w'][l].T + p['out_b'][l]
            x = _layernorm(x + ao, p['n1_g'][l], p['n1_b'][l])
            ff = jnp.maximum(x @ p['ff1_w'][l].T + p['ff1_b'][l], 0.0)
            ff = ff @ p['ff2_w'][l].T + p['ff2_b'][l]
            x = _layernorm(x + ff, p['n2_g'][l], p['n2_b'][l])
        dec = jnp.concatenate([x, sb], axis=-1) @ p['w_dec'].T + p['b_dec']
        return jnp.tanh(dec)
    return jnp.stack([one(src[:, b]) for b in range(BS)], axis=1)


if __name__ == "__main__":
    key = jax.random.PRNGKey(0)
    kx, kp = jax.random.split(key)
    src = jax.random.normal(kx, (S, BS, FEAT), jnp.float32)
    params = init_params(kp)
    packed = pack_params(params)

    out = transformer_forward(src, packed)
    out = jax.block_until_ready(out)

    assert out.shape == (S, BS, OUT)
    ref = reference_forward(src, params)
    np.testing.assert_allclose(np.asarray(out), np.asarray(ref),
                               rtol=3e-3, atol=3e-3)
    print("KERNEL_OK")
</pallas_src>

<mosaic_0001>
module attributes {stable_mosaic.version = 11 : i64} {
  func.func @transformer_kernel(%arg0: memref<16x16xf32, #tpu.memory_space<vmem>>, %arg1: memref<16x32xf32, #tpu.memory_space<vmem>>, %arg2: memref<2x32x96xf32, #tpu.memory_space<vmem>>, %arg3: memref<2x32x32xf32, #tpu.memory_space<vmem>>, %arg4: memref<2x32x64xf32, #tpu.memory_space<vmem>>, %arg5: memref<2x64x32xf32, #tpu.memory_space<vmem>>, %arg6: memref<2x8x128xf32, #tpu.memory_space<vmem>>, %arg7: memref<48x8xf32, #tpu.memory_space<vmem>>, %arg8: memref<2x128xf32, #tpu.memory_space<vmem>>, %arg9: memref<16x8xf32, #tpu.memory_space<vmem>>) attributes {dimension_semantics = [], scalar_prefetch = 0 : i64, scratch_operands = 0 : i64, tpu.core_type = #tpu.core_type<tc>} {
    %c0 = arith.constant 0 : index
    %c0_0 = arith.constant 0 : index
    %0 = vector.load %arg0[%c0, %c0_0] : memref<16x16xf32, #tpu.memory_space<vmem>>, vector<16x16xf32>
    %c0_1 = arith.constant 0 : index
    %c0_2 = arith.constant 0 : index
    %1 = vector.load %arg8[%c0_1, %c0_2] : memref<2x128xf32, #tpu.memory_space<vmem>>, vector<2x128xf32>
    %2 = vector.extract_strided_slice %1 {offsets = [0, 0], sizes = [1, 32], strides = [1, 1]} : vector<2x128xf32> to vector<1x32xf32>
    %3 = vector.extract_strided_slice %1 {offsets = [1, 0], sizes = [1, 8], strides = [1, 1]} : vector<2x128xf32> to vector<1x8xf32>
    %c0_3 = arith.constant 0 : index
    %c0_4 = arith.constant 0 : index
    %4 = vector.load %arg1[%c0_3, %c0_4] : memref<16x32xf32, #tpu.memory_space<vmem>>, vector<16x32xf32>
    %cst = arith.constant dense<0.000000e+00> : vector<16x32xf32>
    %5 = tpu.matmul %0, %4, %cst {dimension_numbers = #tpu.dot_dimension_numbers<[1], [0], [0], [1], [0, 0, 1, 1], [], []>} : vector<16x16xf32>, vector<16x32xf32>, vector<16x32xf32> -> vector<16x32xf32>
    %6 = vector.broadcast %2 : vector<1x32xf32> to vector<16x32xf32>
    %7 = arith.addf %5, %6 : vector<16x32xf32>
    %cst_5 = arith.constant 5.65685415 : f32
    %8 = vector.broadcast %cst_5 : f32 to vector<16x32xf32>
    %9 = arith.mulf %7, %8 : vector<16x32xf32>
    %10 = tpu.iota {dimensions = array<i32: 0>} : vector<16x16xi32>
    %c2_i32 = arith.constant 2 : i32
    %c0_i32 = arith.constant 0 : i32
    %11 = arith.cmpi eq, %c2_i32, %c0_i32 : i32
    %c1_i32 = arith.constant 1 : i32
    %12 = arith.select %11, %c1_i32, %c2_i32 : i32
    %13 = vector.broadcast %12 : i32 to vector<16x16xi32>
    %14 = arith.remsi %10, %13 : vector<16x16xi32>
    %c0_i32_6 = arith.constant 0 : i32
    %15 = vector.broadcast %c0_i32_6 : i32 to vector<16x16xi32>
    %16 = arith.cmpi ne, %14, %15 : vector<16x16xi32>
    %c0_i32_7 = arith.constant 0 : i32
    %17 = vector.broadcast %c0_i32_7 : i32 to vector<16x16xi32>
    %18 = arith.cmpi slt, %14, %17 : vector<16x16xi32>
    %c0_i32_8 = arith.constant 0 : i32
    %19 = arith.cmpi slt, %12, %c0_i32_8 : i32
    %20 = vector.broadcast %19 : i1 to vector<16x16xi1>
    %21 = vector.broadcast %20 : vector<16x16xi1> to vector<16x16xi1>
    %22 = arith.xori %18, %21 : vector<16x16xi1>
    %23 = arith.andi %22, %16 : vector<16x16xi1>
    %24 = vector.broadcast %12 : i32 to vector<16x16xi32>
    %25 = arith.addi %14, %24 : vector<16x16xi32>
    %26 = arith.select %23, %25, %14 : vector<16x16xi1>, vector<16x16xi32>
    %27 = tpu.iota {dimensions = array<i32: 1>} : vector<16x16xi32>
    %c2_i32_9 = arith.constant 2 : i32
    %c0_i32_10 = arith.constant 0 : i32
    %28 = arith.cmpi eq, %c2_i32_9, %c0_i32_10 : i32
    %c1_i32_11 = arith.constant 1 : i32
    %29 = arith.select %28, %c1_i32_11, %c2_i32_9 : i32
    %30 = vector.broadcast %29 : i32 to vector<16x16xi32>
    %31 = arith.remsi %27, %30 : vector<16x16xi32>
    %c0_i32_12 = arith.constant 0 : i32
    %32 = vector.broadcast %c0_i32_12 : i32 to vector<16x16xi32>
    %33 = arith.cmpi ne, %31, %32 : vector<16x16xi32>
    %c0_i32_13 = arith.constant 0 : i32
    %34 = vector.broadcast %c0_i32_13 : i32 to vector<16x16xi32>
    %35 = arith.cmpi slt, %31, %34 : vector<16x16xi32>
    %c0_i32_14 = arith.constant 0 : i32
    %36 = arith.cmpi slt, %29, %c0_i32_14 : i32
    %37 = vector.broadcast %36 : i1 to vector<16x16xi1>
    %38 = vector.broadcast %37 : vector<16x16xi1> to vector<16x16xi1>
    %39 = arith.xori %35, %38 : vector<16x16xi1>
    %40 = arith.andi %39, %33 : vector<16x16xi1>
    %41 = vector.broadcast %29 : i32 to vector<16x16xi32>
    %42 = arith.addi %31, %41 : vector<16x16xi32>
    %43 = arith.select %40, %42, %31 : vector<16x16xi1>, vector<16x16xi32>
    %44 = arith.cmpi eq, %26, %43 : vector<16x16xi32>
    %cst_15 = arith.constant 0.000000e+00 : f32
    %cst_16 = arith.constant -1.000000e+30 : f32
    %45 = vector.broadcast %cst_15 : f32 to vector<16x16xf32>
    %46 = vector.broadcast %cst_16 : f32 to vector<16x16xf32>
    %47 = arith.select %44, %45, %46 : vector<16x16xi1>, vector<16x16xf32>
    %c0_17 = arith.constant 0 : index
    %c0_18 = arith.constant 0 : index
    %c0_19 = arith.constant 0 : index
    %48 = vector.load %arg6[%c0_17, %c0_18, %c0_19] : memref<2x8x128xf32, #tpu.memory_space<vmem>>, vector<1x8x128xf32>
    %49 = vector.shape_cast %48 : vector<1x8x128xf32> to vector<8x128xf32>
    %50 = vector.extract_strided_slice %49 {offsets = [0, 0], sizes = [1, 96], strides = [1, 1]} : vector<8x128xf32> to vector<1x96xf32>
    %51 = vector.extract_strided_slice %49 {offsets = [1, 0], sizes = [1, 32], strides = [1, 1]} : vector<8x128xf32> to vector<1x32xf32>
    %52 = vector.extract_strided_slice %49 {offsets = [2, 0], sizes = [1, 64], strides = [1, 1]} : vector<8x128xf32> to vector<1x64xf32>
    %53 = vector.extract_strided_slice %49 {offsets = [3, 0], sizes = [1, 32], strides = [1, 1]} : vector<8x128xf32> to vector<1x32xf32>
    %54 = vector.extract_strided_slice %49 {offsets = [4, 0], sizes = [1, 32], strides = [1, 1]} : vector<8x128xf32> to vector<1x32xf32>
    %55 = vector.extract_strided_slice %49 {offsets = [5, 0], sizes = [1, 32], strides = [1, 1]} : vector<8x128xf32> to vector<1x32xf32>
    %56 = vector.extract_strided_slice %49 {offsets = [6, 0], sizes = [1, 32], strides = [1, 1]} : vector<8x128xf32> to vector<1x32xf32>
    %57 = vector.extract_strided_slice %49 {offsets = [7, 0], sizes = [1, 32], strides = [1, 1]} : vector<8x128xf32> to vector<1x32xf32>
    %c0_20 = arith.constant 0 : index
    %c0_21 = arith.constant 0 : index
    %c0_22 = arith.constant 0 : index
    %58 = vector.load %arg2[%c0_20, %c0_21, %c0_22] : memref<2x32x96xf32, #tpu.memory_space<vmem>>, vector<1x32x96xf32>
    %59 = vector.shape_cast %58 : vector<1x32x96xf32> to vector<32x96xf32>
    %cst_23 = arith.constant dense<0.000000e+00> : vector<16x96xf32>
    %60 = tpu.matmul %9, %59, %cst_23 {dimension_numbers = #tpu.dot_dimension_numbers<[1], [0], [0], [1], [0, 0, 1, 1], [], []>} : vector<16x32xf32>, vector<32x96xf32>, vector<16x96xf32> -> vector<16x96xf32>
    %61 = vector.broadcast %50 : vector<1x96xf32> to vector<16x96xf32>
    %62 = arith.addf %60, %61 : vector<16x96xf32>
    %63 = vector.extract_strided_slice %62 {offsets = [0, 0], sizes = [16, 32], strides = [1, 1]} : vector<16x96xf32> to vector<16x32xf32>
    %cst_24 = arith.constant 2.500000e-01 : f32
    %64 = vector.broadcast %cst_24 : f32 to vector<16x32xf32>
    %65 = arith.mulf %63, %64 : vector<16x32xf32>
    %66 = vector.extract_strided_slice %62 {offsets = [0, 32], sizes = [16, 32], strides = [1, 1]} : vector<16x96xf32> to vector<16x32xf32>
    %67 = vector.extract_strided_slice %62 {offsets = [0, 64], sizes = [16, 32], strides = [1, 1]} : vector<16x96xf32> to vector<16x32xf32>
    %68 = vector.extract_strided_slice %65 {offsets = [0, 0], sizes = [16, 16], strides = [1, 1]} : vector<16x32xf32> to vector<16x16xf32>
    %69 = vector.extract_strided_slice %66 {offsets = [0, 0], sizes = [16, 16], strides = [1, 1]} : vector<16x32xf32> to vector<16x16xf32>
    %cst_25 = arith.constant dense<0.000000e+00> : vector<16x16xf32>
    %70 = tpu.matmul %68, %69, %cst_25 {dimension_numbers = #tpu.dot_dimension_numbers<[1], [1], [0], [0], [0, 0, 1, 0], [], []>} : vector<16x16xf32>, vector<16x16xf32>, vector<16x16xf32> -> vector<16x16xf32>
    %71 = arith.addf %70, %47 : vector<16x16xf32>
    %cst_26 = arith.constant dense<0xFF800000> : vector<16xf32>
    %72 = vector.multi_reduction <maximumf>, %71, %cst_26 [1] : vector<16x16xf32> to vector<16xf32>
    %73 = vector.shape_cast %72 : vector<16xf32> to vector<16x1xf32>
    %74 = vector.broadcast %73 : vector<16x1xf32> to vector<16x16xf32>
    %75 = arith.subf %71, %74 : vector<16x16xf32>
    %76 = math.exp %75 : vector<16x16xf32>
    %cst_27 = arith.constant dense<0.000000e+00> : vector<16xf32>
    %77 = vector.multi_reduction <add>, %76, %cst_27 [1] : vector<16x16xf32> to vector<16xf32>
    %78 = vector.shape_cast %77 : vector<16xf32> to vector<16x1xf32>
    %79 = tpu.reciprocal %78 {approx = true} : vector<16x1xf32> -> vector<16x1xf32>
    %80 = vector.broadcast %79 : vector<16x1xf32> to vector<16x16xf32>
    %81 = arith.mulf %76, %80 : vector<16x16xf32>
    %82 = vector.extract_strided_slice %67 {offsets = [0, 0], sizes = [16, 16], strides = [1, 1]} : vector<16x32xf32> to vector<16x16xf32>
    %cst_28 = arith.constant dense<0.000000e+00> : vector<16x16xf32>
    %83 = tpu.matmul %81, %82, %cst_28 {dimension_numbers = #tpu.dot_dimension_numbers<[1], [0], [0], [1], [0, 0, 1, 1], [], []>} : vector<16x16xf32>, vector<16x16xf32>, vector<16x16xf32> -> vector<16x16xf32>
    %84 = vector.extract_strided_slice %65 {offsets = [0, 16], sizes = [16, 16], strides = [1, 1]} : vector<16x32xf32> to vector<16x16xf32>
    %85 = vector.extract_strided_slice %66 {offsets = [0, 16], sizes = [16, 16], strides = [1, 1]} : vector<16x32xf32> to vector<16x16xf32>
    %cst_29 = arith.constant dense<0.000000e+00> : vector<16x16xf32>
    %86 = tpu.matmul %84, %85, %cst_29 {dimension_numbers = #tpu.dot_dimension_numbers<[1], [1], [0], [0], [0, 0, 1, 0], [], []>} : vector<16x16xf32>, vector<16x16xf32>, vector<16x16xf32> -> vector<16x16xf32>
    %87 = arith.addf %86, %47 : vector<16x16xf32>
    %cst_30 = arith.constant dense<0xFF800000> : vector<16xf32>
    %88 = vector.multi_reduction <maximumf>, %87, %cst_30 [1] : vector<16x16xf32> to vector<16xf32>
    %89 = vector.shape_cast %88 : vector<16xf32> to vector<16x1xf32>
    %90 = vector.broadcast %89 : vector<16x1xf32> to vector<16x16xf32>
    %91 = arith.subf %87, %90 : vector<16x16xf32>
    %92 = math.exp %91 : vector<16x16xf32>
    %cst_31 = arith.constant dense<0.000000e+00> : vector<16xf32>
    %93 = vector.multi_reduction <add>, %92, %cst_31 [1] : vector<16x16xf32> to vector<16xf32>
    %94 = vector.shape_cast %93 : vector<16xf32> to vector<16x1xf32>
    %95 = tpu.reciprocal %94 {approx = true} : vector<16x1xf32> -> vector<16x1xf32>
    %96 = vector.broadcast %95 : vector<16x1xf32> to vector<16x16xf32>
    %97 = arith.mulf %92, %96 : vector<16x16xf32>
    %98 = vector.extract_strided_slice %67 {offsets = [0, 16], sizes = [16, 16], strides = [1, 1]} : vector<16x32xf32> to vector<16x16xf32>
    %cst_32 = arith.constant dense<0.000000e+00> : vector<16x16xf32>
    %99 = tpu.matmul %97, %98, %cst_32 {dimension_numbers = #tpu.dot_dimension_numbers<[1], [0], [0], [1], [0, 0, 1, 1], [], []>} : vector<16x16xf32>, vector<16x16xf32>, vector<16x16xf32> -> vector<16x16xf32>
    %100 = tpu.concatenate %83, %99 in 1 : vector<16x16xf32>, vector<16x16xf32> -> vector<16x32xf32>
    %c0_33 = arith.constant 0 : index
    %c0_34 = arith.constant 0 : index
    %c0_35 = arith.constant 0 : index
    %101 = vector.load %arg3[%c0_33, %c0_34, %c0_35] : memref<2x32x32xf32, #tpu.memory_space<vmem>>, vector<1x32x32xf32>
    %102 = vector.shape_cast %101 : vector<1x32x32xf32> to vector<32x32xf32>
    %cst_36 = arith.constant dense<0.000000e+00> : vector<16x32xf32>
    %103 = tpu.matmul %100, %102, %cst_36 {dimension_numbers = #tpu.dot_dimension_numbers<[1], [0], [0], [1], [0, 0, 1, 1], [], []>} : vector<16x32xf32>, vector<32x32xf32>, vector<16x32xf32> -> vector<16x32xf32>
    %104 = vector.broadcast %51 : vector<1x32xf32> to vector<16x32xf32>
    %105 = arith.addf %103, %104 : vector<16x32xf32>
    %106 = arith.addf %9, %105 : vector<16x32xf32>
    %cst_37 = arith.constant dense<0.000000e+00> : vector<16xf32>
    %107 = vector.multi_reduction <add>, %106, %cst_37 [1] : vector<16x32xf32> to vector<16xf32>
    %108 = vector.shape_cast %107 : vector<16xf32> to vector<16x1xf32>
    %cst_38 = arith.constant 3.200000e+01 : f32
    %109 = vector.broadcast %cst_38 : f32 to vector<16x1xf32>
    %110 = arith.divf %108, %109 : vector<16x1xf32>
    %111 = vector.broadcast %110 : vector<16x1xf32> to vector<16x32xf32>
    %112 = arith.subf %106, %111 : vector<16x32xf32>
    %113 = arith.mulf %112, %112 : vector<16x32xf32>
    %cst_39 = arith.constant dense<0.000000e+00> : vector<16xf32>
    %114 = vector.multi_reduction <add>, %113, %cst_39 [1] : vector<16x32xf32> to vector<16xf32>
    %115 = vector.shape_cast %114 : vector<16xf32> to vector<16x1xf32>
    %cst_40 = arith.constant 3.200000e+01 : f32
    %116 = vector.broadcast %cst_40 : f32 to vector<16x1xf32>
    %117 = arith.divf %115, %116 : vector<16x1xf32>
    %118 = vector.broadcast %110 : vector<16x1xf32> to vector<16x32xf32>
    %119 = arith.subf %106, %118 : vector<16x32xf32>
    %cst_41 = arith.constant 9.99999974E-6 : f32
    %120 = vector.broadcast %cst_41 : f32 to vector<16x1xf32>
    %121 = arith.addf %117, %120 : vector<16x1xf32>
    %122 = math.rsqrt %121 : vector<16x1xf32>
    %123 = vector.broadcast %122 : vector<16x1xf32> to vector<16x32xf32>
    %124 = arith.mulf %119, %123 : vector<16x32xf32>
    %125 = vector.broadcast %54 : vector<1x32xf32> to vector<16x32xf32>
    %126 = arith.mulf %124, %125 : vector<16x32xf32>
    %127 = vector.broadcast %55 : vector<1x32xf32> to vector<16x32xf32>
    %128 = arith.addf %126, %127 : vector<16x32xf32>
    %c0_42 = arith.constant 0 : index
    %c0_43 = arith.constant 0 : index
    %c0_44 = arith.constant 0 : index
    %129 = vector.load %arg4[%c0_42, %c0_43, %c0_44] : memref<2x32x64xf32, #tpu.memory_space<vmem>>, vector<1x32x64xf32>
    %130 = vector.shape_cast %129 : vector<1x32x64xf32> to vector<32x64xf32>
    %cst_45 = arith.constant dense<0.000000e+00> : vector<16x64xf32>
    %131 = tpu.matmul %128, %130, %cst_45 {dimension_numbers = #tpu.dot_dimension_numbers<[1], [0], [0], [1], [0, 0, 1, 1], [], []>} : vector<16x32xf32>, vector<32x64xf32>, vector<16x64xf32> -> vector<16x64xf32>
    %132 = vector.broadcast %52 : vector<1x64xf32> to vector<16x64xf32>
    %133 = arith.addf %131, %132 : vector<16x64xf32>
    %cst_46 = arith.constant 0.000000e+00 : f32
    %134 = vector.broadcast %cst_46 : f32 to vector<16x64xf32>
    %135 = arith.maximumf %133, %134 : vector<16x64xf32>
    %c0_47 = arith.constant 0 : index
    %c0_48 = arith.constant 0 : index
    %c0_49 = arith.constant 0 : index
    %136 = vector.load %arg5[%c0_47, %c0_48, %c0_49] : memref<2x64x32xf32, #tpu.memory_space<vmem>>, vector<1x64x32xf32>
    %137 = vector.shape_cast %136 : vector<1x64x32xf32> to vector<64x32xf32>
    %cst_50 = arith.constant dense<0.000000e+00> : vector<16x32xf32>
    %138 = tpu.matmul %135, %137, %cst_50 {dimension_numbers = #tpu.dot_dimension_numbers<[1], [0], [0], [1], [0, 0, 1, 1], [], []>} : vector<16x64xf32>, vector<64x32xf32>, vector<16x32xf32> -> vector<16x32xf32>
    %139 = vector.broadcast %53 : vector<1x32xf32> to vector<16x32xf32>
    %140 = arith.addf %138, %139 : vector<16x32xf32>
    %141 = arith.addf %128, %140 : vector<16x32xf32>
    %cst_51 = arith.constant dense<0.000000e+00> : vector<16xf32>
    %142 = vector.multi_reduction <add>, %141, %cst_51 [1] : vector<16x32xf32> to vector<16xf32>
    %143 = vector.shape_cast %142 : vector<16xf32> to vector<16x1xf32>
    %cst_52 = arith.constant 3.200000e+01 : f32
    %144 = vector.broadcast %cst_52 : f32 to vector<16x1xf32>
    %145 = arith.divf %143, %144 : vector<16x1xf32>
    %146 = vector.broadcast %145 : vector<16x1xf32> to vector<16x32xf32>
    %147 = arith.subf %141, %146 : vector<16x32xf32>
    %148 = arith.mulf %147, %147 : vector<16x32xf32>
    %cst_53 = arith.constant dense<0.000000e+00> : vector<16xf32>
    %149 = vector.multi_reduction <add>, %148, %cst_53 [1] : vector<16x32xf32> to vector<16xf32>
    %150 = vector.shape_cast %149 : vector<16xf32> to vector<16x1xf32>
    %cst_54 = arith.constant 3.200000e+01 : f32
    %151 = vector.broadcast %cst_54 : f32 to vector<16x1xf32>
    %152 = arith.divf %150, %151 : vector<16x1xf32>
    %153 = vector.broadcast %145 : vector<16x1xf32> to vector<16x32xf32>
    %154 = arith.subf %141, %153 : vector<16x32xf32>
    %cst_55 = arith.constant 9.99999974E-6 : f32
    %155 = vector.broadcast %cst_55 : f32 to vector<16x1xf32>
    %156 = arith.addf %152, %155 : vector<16x1xf32>
    %157 = math.rsqrt %156 : vector<16x1xf32>
    %158 = vector.broadcast %157 : vector<16x1xf32> to vector<16x32xf32>
    %159 = arith.mulf %154, %158 : vector<16x32xf32>
    %160 = vector.broadcast %56 : vector<1x32xf32> to vector<16x32xf32>
    %161 = arith.mulf %159, %160 : vector<16x32xf32>
    %162 = vector.broadcast %57 : vector<1x32xf32> to vector<16x32xf32>
    %163 = arith.addf %161, %162 : vector<16x32xf32>
    %c1 = arith.constant 1 : index
    %c0_56 = arith.constant 0 : index
    %c0_57 = arith.constant 0 : index
    %164 = vector.load %arg6[%c1, %c0_56, %c0_57] : memref<2x8x128xf32, #tpu.memory_space<vmem>>, vector<1x8x128xf32>
    %165 = vector.shape_cast %164 : vector<1x8x128xf32> to vector<8x128xf32>
    %166 = vector.extract_strided_slice %165 {offsets = [0, 0], sizes = [1, 96], strides = [1, 1]} : vector<8x128xf32> to vector<1x96xf32>
    %167 = vector.extract_strided_slice %165 {offsets = [1, 0], sizes = [1, 32], strides = [1, 1]} : vector<8x128xf32> to vector<1x32xf32>
    %168 = vector.extract_strided_slice %165 {offsets = [2, 0], sizes = [1, 64], strides = [1, 1]} : vector<8x128xf32> to vector<1x64xf32>
    %169 = vector.extract_strided_slice %165 {offsets = [3, 0], sizes = [1, 32], strides = [1, 1]} : vector<8x128xf32> to vector<1x32xf32>
    %170 = vector.extract_strided_slice %165 {offsets = [4, 0], sizes = [1, 32], strides = [1, 1]} : vector<8x128xf32> to vector<1x32xf32>
    %171 = vector.extract_strided_slice %165 {offsets = [5, 0], sizes = [1, 32], strides = [1, 1]} : vector<8x128xf32> to vector<1x32xf32>
    %172 = vector.extract_strided_slice %165 {offsets = [6, 0], sizes = [1, 32], strides = [1, 1]} : vector<8x128xf32> to vector<1x32xf32>
    %173 = vector.extract_strided_slice %165 {offsets = [7, 0], sizes = [1, 32], strides = [1, 1]} : vector<8x128xf32> to vector<1x32xf32>
    %c1_58 = arith.constant 1 : index
    %c0_59 = arith.constant 0 : index
    %c0_60 = arith.constant 0 : index
    %174 = vector.load %arg2[%c1_58, %c0_59, %c0_60] : memref<2x32x96xf32, #tpu.memory_space<vmem>>, vector<1x32x96xf32>
    %175 = vector.shape_cast %174 : vector<1x32x96xf32> to vector<32x96xf32>
    %cst_61 = arith.constant dense<0.000000e+00> : vector<16x96xf32>
    %176 = tpu.matmul %163, %175, %cst_61 {dimension_numbers = #tpu.dot_dimension_numbers<[1], [0], [0], [1], [0, 0, 1, 1], [], []>} : vector<16x32xf32>, vector<32x96xf32>, vector<16x96xf32> -> vector<16x96xf32>
    %177 = vector.broadcast %166 : vector<1x96xf32> to vector<16x96xf32>
    %178 = arith.addf %176, %177 : vector<16x96xf32>
    %179 = vector.extract_strided_slice %178 {offsets = [0, 0], sizes = [16, 32], strides = [1, 1]} : vector<16x96xf32> to vector<16x32xf32>
    %cst_62 = arith.constant 2.500000e-01 : f32
    %180 = vector.broadcast %cst_62 : f32 to vector<16x32xf32>
    %181 = arith.mulf %179, %180 : vector<16x32xf32>
    %182 = vector.extract_strided_slice %178 {offsets = [0, 32], sizes = [16, 32], strides = [1, 1]} : vector<16x96xf32> to vector<16x32xf32>
    %183 = vector.extract_strided_slice %178 {offsets = [0, 64], sizes = [16, 32], strides = [1, 1]} : vector<16x96xf32> to vector<16x32xf32>
    %184 = vector.extract_strided_slice %181 {offsets = [0, 0], sizes = [16, 16], strides = [1, 1]} : vector<16x32xf32> to vector<16x16xf32>
    %185 = vector.extract_strided_slice %182 {offsets = [0, 0], sizes = [16, 16], strides = [1, 1]} : vector<16x32xf32> to vector<16x16xf32>
    %cst_63 = arith.constant dense<0.000000e+00> : vector<16x16xf32>
    %186 = tpu.matmul %184, %185, %cst_63 {dimension_numbers = #tpu.dot_dimension_numbers<[1], [1], [0], [0], [0, 0, 1, 0], [], []>} : vector<16x16xf32>, vector<16x16xf32>, vector<16x16xf32> -> vector<16x16xf32>
    %187 = arith.addf %186, %47 : vector<16x16xf32>
    %cst_64 = arith.constant dense<0xFF800000> : vector<16xf32>
    %188 = vector.multi_reduction <maximumf>, %187, %cst_64 [1] : vector<16x16xf32> to vector<16xf32>
    %189 = vector.shape_cast %188 : vector<16xf32> to vector<16x1xf32>
    %190 = vector.broadcast %189 : vector<16x1xf32> to vector<16x16xf32>
    %191 = arith.subf %187, %190 : vector<16x16xf32>
    %192 = math.exp %191 : vector<16x16xf32>
    %cst_65 = arith.constant dense<0.000000e+00> : vector<16xf32>
    %193 = vector.multi_reduction <add>, %192, %cst_65 [1] : vector<16x16xf32> to vector<16xf32>
    %194 = vector.shape_cast %193 : vector<16xf32> to vector<16x1xf32>
    %195 = tpu.reciprocal %194 {approx = true} : vector<16x1xf32> -> vector<16x1xf32>
    %196 = vector.broadcast %195 : vector<16x1xf32> to vector<16x16xf32>
    %197 = arith.mulf %192, %196 : vector<16x16xf32>
    %198 = vector.extract_strided_slice %183 {offsets = [0, 0], sizes = [16, 16], strides = [1, 1]} : vector<16x32xf32> to vector<16x16xf32>
    %cst_66 = arith.constant dense<0.000000e+00> : vector<16x16xf32>
    %199 = tpu.matmul %197, %198, %cst_66 {dimension_numbers = #tpu.dot_dimension_numbers<[1], [0], [0], [1], [0, 0, 1, 1], [], []>} : vector<16x16xf32>, vector<16x16xf32>, vector<16x16xf32> -> vector<16x16xf32>
    %200 = vector.extract_strided_slice %181 {offsets = [0, 16], sizes = [16, 16], strides = [1, 1]} : vector<16x32xf32> to vector<16x16xf32>
    %201 = vector.extract_strided_slice %182 {offsets = [0, 16], sizes = [16, 16], strides = [1, 1]} : vector<16x32xf32> to vector<16x16xf32>
    %cst_67 = arith.constant dense<0.000000e+00> : vector<16x16xf32>
    %202 = tpu.matmul %200, %201, %cst_67 {dimension_numbers = #tpu.dot_dimension_numbers<[1], [1], [0], [0], [0, 0, 1, 0], [], []>} : vector<16x16xf32>, vector<16x16xf32>, vector<16x16xf32> -> vector<16x16xf32>
    %203 = arith.addf %202, %47 : vector<16x16xf32>
    %cst_68 = arith.constant dense<0xFF800000> : vector<16xf32>
    %204 = vector.multi_reduction <maximumf>, %203, %cst_68 [1] : vector<16x16xf32> to vector<16xf32>
    %205 = vector.shape_cast %204 : vector<16xf32> to vector<16x1xf32>
    %206 = vector.broadcast %205 : vector<16x1xf32> to vector<16x16xf32>
    %207 = arith.subf %203, %206 : vector<16x16xf32>
    %208 = math.exp %207 : vector<16x16xf32>
    %cst_69 = arith.constant dense<0.000000e+00> : vector<16xf32>
    %209 = vector.multi_reduction <add>, %208, %cst_69 [1] : vector<16x16xf32> to vector<16xf32>
    %210 = vector.shape_cast %209 : vector<16xf32> to vector<16x1xf32>
    %211 = tpu.reciprocal %210 {approx = true} : vector<16x1xf32> -> vector<16x1xf32>
    %212 = vector.broadcast %211 : vector<16x1xf32> to vector<16x16xf32>
    %213 = arith.mulf %208, %212 : vector<16x16xf32>
    %214 = vector.extract_strided_slice %183 {offsets = [0, 16], sizes = [16, 16], strides = [1, 1]} : vector<16x32xf32> to vector<16x16xf32>
    %cst_70 = arith.constant dense<0.000000e+00> : vector<16x16xf32>
    %215 = tpu.matmul %213, %214, %cst_70 {dimension_numbers = #tpu.dot_dimension_numbers<[1], [0], [0], [1], [0, 0, 1, 1], [], []>} : vector<16x16xf32>, vector<16x16xf32>, vector<16x16xf32> -> vector<16x16xf32>
    %216 = tpu.concatenate %199, %215 in 1 : vector<16x16xf32>, vector<16x16xf32> -> vector<16x32xf32>
    %c1_71 = arith.constant 1 : index
    %c0_72 = arith.constant 0 : index
    %c0_73 = arith.constant 0 : index
    %217 = vector.load %arg3[%c1_71, %c0_72, %c0_73] : memref<2x32x32xf32, #tpu.memory_space<vmem>>, vector<1x32x32xf32>
    %218 = vector.shape_cast %217 : vector<1x32x32xf32> to vector<32x32xf32>
    %cst_74 = arith.constant dense<0.000000e+00> : vector<16x32xf32>
    %219 = tpu.matmul %216, %218, %cst_74 {dimension_numbers = #tpu.dot_dimension_numbers<[1], [0], [0], [1], [0, 0, 1, 1], [], []>} : vector<16x32xf32>, vector<32x32xf32>, vector<16x32xf32> -> vector<16x32xf32>
    %220 = vector.broadcast %167 : vector<1x32xf32> to vector<16x32xf32>
    %221 = arith.addf %219, %220 : vector<16x32xf32>
    %222 = arith.addf %163, %221 : vector<16x32xf32>
    %cst_75 = arith.constant dense<0.000000e+00> : vector<16xf32>
    %223 = vector.multi_reduction <add>, %222, %cst_75 [1] : vector<16x32xf32> to vector<16xf32>
    %224 = vector.shape_cast %223 : vector<16xf32> to vector<16x1xf32>
    %cst_76 = arith.constant 3.200000e+01 : f32
    %225 = vector.broadcast %cst_76 : f32 to vector<16x1xf32>
    %226 = arith.divf %224, %225 : vector<16x1xf32>
    %227 = vector.broadcast %226 : vector<16x1xf32> to vector<16x32xf32>
    %228 = arith.subf %222, %227 : vector<16x32xf32>
    %229 = arith.mulf %228, %228 : vector<16x32xf32>
    %cst_77 = arith.constant dense<0.000000e+00> : vector<16xf32>
    %230 = vector.multi_reduction <add>, %229, %cst_77 [1] : vector<16x32xf32> to vector<16xf32>
    %231 = vector.shape_cast %230 : vector<16xf32> to vector<16x1xf32>
    %cst_78 = arith.constant 3.200000e+01 : f32
    %232 = vector.broadcast %cst_78 : f32 to vector<16x1xf32>
    %233 = arith.divf %231, %232 : vector<16x1xf32>
    %234 = vector.broadcast %226 : vector<16x1xf32> to vector<16x32xf32>
    %235 = arith.subf %222, %234 : vector<16x32xf32>
    %cst_79 = arith.constant 9.99999974E-6 : f32
    %236 = vector.broadcast %cst_79 : f32 to vector<16x1xf32>
    %237 = arith.addf %233, %236 : vector<16x1xf32>
    %238 = math.rsqrt %237 : vector<16x1xf32>
    %239 = vector.broadcast %238 : vector<16x1xf32> to vector<16x32xf32>
    %240 = arith.mulf %235, %239 : vector<16x32xf32>
    %241 = vector.broadcast %170 : vector<1x32xf32> to vector<16x32xf32>
    %242 = arith.mulf %240, %241 : vector<16x32xf32>
    %243 = vector.broadcast %171 : vector<1x32xf32> to vector<16x32xf32>
    %244 = arith.addf %242, %243 : vector<16x32xf32>
    %c1_80 = arith.constant 1 : index
    %c0_81 = arith.constant 0 : index
    %c0_82 = arith.constant 0 : index
    %245 = vector.load %arg4[%c1_80, %c0_81, %c0_82] : memref<2x32x64xf32, #tpu.memory_space<vmem>>, vector<1x32x64xf32>
    %246 = vector.shape_cast %245 : vector<1x32x64xf32> to vector<32x64xf32>
    %cst_83 = arith.constant dense<0.000000e+00> : vector<16x64xf32>
    %247 = tpu.matmul %244, %246, %cst_83 {dimension_numbers = #tpu.dot_dimension_numbers<[1], [0], [0], [1], [0, 0, 1, 1], [], []>} : vector<16x32xf32>, vector<32x64xf32>, vector<16x64xf32> -> vector<16x64xf32>
    %248 = vector.broadcast %168 : vector<1x64xf32> to vector<16x64xf32>
    %249 = arith.addf %247, %248 : vector<16x64xf32>
    %cst_84 = arith.constant 0.000000e+00 : f32
    %250 = vector.broadcast %cst_84 : f32 to vector<16x64xf32>
    %251 = arith.maximumf %249, %250 : vector<16x64xf32>
    %c1_85 = arith.constant 1 : index
    %c0_86 = arith.constant 0 : index
    %c0_87 = arith.constant 0 : index
    %252 = vector.load %arg5[%c1_85, %c0_86, %c0_87] : memref<2x64x32xf32, #tpu.memory_space<vmem>>, vector<1x64x32xf32>
    %253 = vector.shape_cast %252 : vector<1x64x32xf32> to vector<64x32xf32>
    %cst_88 = arith.constant dense<0.000000e+00> : vector<16x32xf32>
    %254 = tpu.matmul %251, %253, %cst_88 {dimension_numbers = #tpu.dot_dimension_numbers<[1], [0], [0], [1], [0, 0, 1, 1], [], []>} : vector<16x64xf32>, vector<64x32xf32>, vector<16x32xf32> -> vector<16x32xf32>
    %255 = vector.broadcast %169 : vector<1x32xf32> to vector<16x32xf32>
    %256 = arith.addf %254, %255 : vector<16x32xf32>
    %257 = arith.addf %244, %256 : vector<16x32xf32>
    %cst_89 = arith.constant dense<0.000000e+00> : vector<16xf32>
    %258 = vector.multi_reduction <add>, %257, %cst_89 [1] : vector<16x32xf32> to vector<16xf32>
    %259 = vector.shape_cast %258 : vector<16xf32> to vector<16x1xf32>
    %cst_90 = arith.constant 3.200000e+01 : f32
    %260 = vector.broadcast %cst_90 : f32 to vector<16x1xf32>
    %261 = arith.divf %259, %260 : vector<16x1xf32>
    %262 = vector.broadcast %261 : vector<16x1xf32> to vector<16x32xf32>
    %263 = arith.subf %257, %262 : vector<16x32xf32>
    %264 = arith.mulf %263, %263 : vector<16x32xf32>
    %cst_91 = arith.constant dense<0.000000e+00> : vector<16xf32>
    %265 = vector.multi_reduction <add>, %264, %cst_91 [1] : vector<16x32xf32> to vector<16xf32>
    %266 = vector.shape_cast %265 : vector<16xf32> to vector<16x1xf32>
    %cst_92 = arith.constant 3.200000e+01 : f32
    %267 = vector.broadcast %cst_92 : f32 to vector<16x1xf32>
    %268 = arith.divf %266, %267 : vector<16x1xf32>
    %269 = vector.broadcast %261 : vector<16x1xf32> to vector<16x32xf32>
    %270 = arith.subf %257, %269 : vector<16x32xf32>
    %cst_93 = arith.constant 9.99999974E-6 : f32
    %271 = vector.broadcast %cst_93 : f32 to vector<16x1xf32>
    %272 = arith.addf %268, %271 : vector<16x1xf32>
    %273 = math.rsqrt %272 : vector<16x1xf32>
    %274 = vector.broadcast %273 : vector<16x1xf32> to vector<16x32xf32>
    %275 = arith.mulf %270, %274 : vector<16x32xf32>
    %276 = vector.broadcast %172 : vector<1x32xf32> to vector<16x32xf32>
    %277 = arith.mulf %275, %276 : vector<16x32xf32>
    %278 = vector.broadcast %173 : vector<1x32xf32> to vector<16x32xf32>
    %279 = arith.addf %277, %278 : vector<16x32xf32>
    %280 = tpu.concatenate %279, %0 in 1 : vector<16x32xf32>, vector<16x16xf32> -> vector<16x48xf32>
    %c0_94 = arith.constant 0 : index
    %c0_95 = arith.constant 0 : index
    %281 = vector.load %arg7[%c0_94, %c0_95] : memref<48x8xf32, #tpu.memory_space<vmem>>, vector<48x8xf32>
    %cst_96 = arith.constant dense<0.000000e+00> : vector<16x8xf32>
    %282 = tpu.matmul %280, %281, %cst_96 {dimension_numbers = #tpu.dot_dimension_numbers<[1], [0], [0], [1], [0, 0, 1, 1], [], []>} : vector<16x48xf32>, vector<48x8xf32>, vector<16x8xf32> -> vector<16x8xf32>
    %283 = vector.broadcast %3 : vector<1x8xf32> to vector<16x8xf32>
    %284 = arith.addf %282, %283 : vector<16x8xf32>
    %285 = math.tanh %284 : vector<16x8xf32>
    %c0_97 = arith.constant 0 : index
    %c0_98 = arith.constant 0 : index
    %286 = vector.load %arg9[%c0_97, %c0_98] : memref<16x8xf32, #tpu.memory_space<vmem>>, vector<16x8xf32>
    tpu.vector_store %arg9[%c0_97, %c0_98], %285 {strides = array<i32>} : memref<16x8xf32, #tpu.memory_space<vmem>>, vector<16x8xf32>,
    return
  }
}

</mosaic_0001>

<llo_original>
// kernel: tpu_custom_call.1
$region0: #{tpu_custom_call.1}
  #allocation0 [shape = 'u32[]', space=smem, size = 0x4, offset = 0x4, fixed_abs, tag = 'smem constant byte address 0x4 - core index']
  #allocation1 [shape = 'u32[144,128]{1,0:T(1,128)}', space=vmem, size = 0x12000, scoped, tag = 'internal scratch']
  %s0 = inlined_call_operand.hbm [shape: f32[16,16], index: 0, kind: input, shape index: {}]
  %s1 = inlined_call_operand.hbm [shape: f32[16,32], index: 1, kind: input, shape index: {}]
  %s2 = inlined_call_operand.vmem [shape: f32[2,32,96], index: 2, kind: input, shape index: {}]
  %s3 = inlined_call_operand.vmem [shape: f32[2,32,32], index: 3, kind: input, shape index: {}]
  %s4 = inlined_call_operand.vmem [shape: f32[2,32,64], index: 4, kind: input, shape index: {}]
  %s5 = inlined_call_operand.vmem [shape: f32[2,64,32], index: 5, kind: input, shape index: {}]
  %s6 = inlined_call_operand.hbm [shape: f32[2,8,128], index: 6, kind: input, shape index: {}]
  %s7 = inlined_call_operand.vmem [shape: f32[48,8], index: 7, kind: input, shape index: {}]
  %s8 = inlined_call_operand.vmem [shape: f32[2,128], index: 8, kind: input, shape index: {}]
  %s9 = inlined_call_operand.vmem [shape: f32[16,8], index: 9, kind: output, shape index: {}]
  %s10 = sld [smem:[#allocation0]]
  $region58: #{tpu_custom_call.1} parent=0
    _
  %s12 = ssub.s32 1, %s10
  %s13 = scalar_select 0, %s12, %s10
  $region1: #{tpu_custom_call.1} parent=0
    #allocation2 [shape = 'u8[8192]{0}', space=vmem, size = 0x2000, scoped, tag = 'input window, operand 0, single buffered']
    #allocation3 [shape = 's32[1]{0}', space=sflag, size = 0x4, scoped, tag = 'scoped memory for tpu_custom_call.1']
    #allocation4 [shape = 'u8[8192]{0}', space=vmem, size = 0x2000, scoped, tag = 'input window, operand 1, single buffered']
    #allocation5 [shape = 's32[1]{0}', space=sflag, size = 0x4, scoped, tag = 'scoped memory for tpu_custom_call.1']
    #allocation6 [shape = 'u8[8192]{0}', space=vmem, size = 0x2000, scoped, tag = 'input window, operand 6, single buffered']
    %14 = vsyncpa [#allocation3], 0
    %15 = vsyncpa [#allocation5], 0
    // Predicated region
    $region2: #{tpu_custom_call.1} parent=1 // pred_check
      _
    $region3: #{tpu_custom_call.1} parent=1 // pred_check_branch
      %17 = sbr.rel (0) target = $region5
    $region4: #{tpu_custom_call.1} parent=1 // pred_region
      %s19 = ssub.s32 256, 256
      %20 = vsyncadd [#allocation3], %s19
      %s21 = sshll.u32 [#allocation2], 4
      %s22 = int_to_ptr.vmem [resolvable:$true] %s21
      %27 = dma.hbm_to_vmem [thread:$0]  %s0, 256, %s22, [#allocation3], 128, 128, 8
    $region5: #{tpu_custom_call.1} parent=1 // pred_fallthru
      _
    // Predicated region
    $region6: #{tpu_custom_call.1} parent=1 // pred_check
      _
    $region7: #{tpu_custom_call.1} parent=1 // pred_check_branch
      %29 = sbr.rel (0) target = $region9
    $region8: #{tpu_custom_call.1} parent=1 // pred_region
      %s31 = ssub.s32 256, 256
      %32 = vsyncadd [#allocation5], %s31
      %s33 = sshll.u32 [#allocation4], 4
      %s34 = int_to_ptr.vmem [resolvable:$true] %s33
      %39 = dma.hbm_to_vmem [thread:$0]  %s1, 256, %s34, [#allocation5], 128, 128, 8
    $region9: #{tpu_custom_call.1} parent=1 // pred_fallthru
      _
    // Predicated region
    $region10: #{tpu_custom_call.1} parent=1 // pred_check
      _
    $region11: #{tpu_custom_call.1} parent=1 // pred_check_branch
      %41 = sbr.rel (0) target = $region13
    $region12: #{tpu_custom_call.1} parent=1 // pred_region
      _
    $region13: #{tpu_custom_call.1} parent=1 // pred_fallthru
      _
    // Predicated region
    $region14: #{tpu_custom_call.1} parent=1 // pred_check
      _
    $region15: #{tpu_custom_call.1} parent=1 // pred_check_branch
      %43 = sbr.rel (0) target = $region17
    $region16: #{tpu_custom_call.1} parent=1 // pred_region
      _
    $region17: #{tpu_custom_call.1} parent=1 // pred_fallthru
      _
    // Predicated region
    $region18: #{tpu_custom_call.1} parent=1 // pred_check
      _
    $region19: #{tpu_custom_call.1} parent=1 // pred_check_branch
      %45 = sbr.rel (0) target = $region21
    $region20: #{tpu_custom_call.1} parent=1 // pred_region
      _
    $region21: #{tpu_custom_call.1} parent=1 // pred_fallthru
      _
    // Predicated region
    $region22: #{tpu_custom_call.1} parent=1 // pred_check
      _
    $region23: #{tpu_custom_call.1} parent=1 // pred_check_branch
      %47 = sbr.rel (0) target = $region25
    $region24: #{tpu_custom_call.1} parent=1 // pred_region
      _
    $region25: #{tpu_custom_call.1} parent=1 // pred_fallthru
      _
    // Predicated region
    $region26: #{tpu_custom_call.1} parent=1 // pred_check
      _
    $region27: #{tpu_custom_call.1} parent=1 // pred_check_branch
      %49 = sbr.rel (0) target = $region29
    $region28: #{tpu_custom_call.1} parent=1 // pred_region
      %s51 = ssub.s32 256, 256
      %52 = vsyncadd [#allocation5], %s51
      %s53 = sshll.u32 [#allocation6], 4
      %s54 = int_to_ptr.vmem [resolvable:$true] %s53
      %59 = dma.hbm_to_vmem [thread:$0]  %s6, 256, %s54, [#allocation5], 128, 128, 8
    $region29: #{tpu_custom_call.1} parent=1 // pred_fallthru
      _
    // Predicated region
    $region30: #{tpu_custom_call.1} parent=1 // pred_check
      _
    $region31: #{tpu_custom_call.1} parent=1 // pred_check_branch
      %61 = sbr.rel (0) target = $region33
    $region32: #{tpu_custom_call.1} parent=1 // pred_region
      _
    $region33: #{tpu_custom_call.1} parent=1 // pred_fallthru
      _
    // Predicated region
    $region34: #{tpu_custom_call.1} parent=1 // pred_check
      _
    $region35: #{tpu_custom_call.1} parent=1 // pred_check_branch
      %63 = sbr.rel (0) target = $region37
    $region36: #{tpu_custom_call.1} parent=1 // pred_region
      _
    $region37: #{tpu_custom_call.1} parent=1 // pred_fallthru
      _
    // Predicated region
    $region38: #{tpu_custom_call.1} parent=1 // pred_check
      _
    $region39: #{tpu_custom_call.1} parent=1 // pred_check_branch
      %65 = sbr.rel (0) target = $region41
    $region40: #{tpu_custom_call.1} parent=1 // pred_region
      %66 = dma.done [#allocation3], 256
    $region41: #{tpu_custom_call.1} parent=1 // pred_fallthru
      _
    // Predicated region
    $region42: #{tpu_custom_call.1} parent=1 // pred_check
      _
    $region43: #{tpu_custom_call.1} parent=1 // pred_check_branch
      %68 = sbr.rel (0) target = $region45
    $region44: #{tpu_custom_call.1} parent=1 // pred_region
      %69 = dma.done [#allocation5], 256
    $region45: #{tpu_custom_call.1} parent=1 // pred_fallthru
      _
    // Predicated region
    $region46: #{tpu_custom_call.1} parent=1 // pred_check
      _
    $region47: #{tpu_custom_call.1} parent=1 // pred_check_branch
      %71 = sbr.rel (0) target = $region49
    $region48: #{tpu_custom_call.1} parent=1 // pred_region
      %72 = dma.done [#allocation5], 256
    $region49: #{tpu_custom_call.1} parent=1 // pred_fallthru
      _
    %v73 = vld [vmem:[#allocation2] sm:$0xff]
    %v74 = vld [vmem:[#allocation2 + $0x8] sm:$0xff]
    %v75 = vld [vmem:[%s8] sm:$0x3]
    %v76 = vld [vmem:[#allocation4] sm:$0xff]
    %v77 = vld [vmem:[#allocation4 + $0x8] sm:$0xff]
    %v78 = vlaneseq
    %v79 = vshrl.u32 %v78, 7
    %v80 = vsub.s32 0, %v79
    %v81 = vrot.slane %v75, %v80
    %vm82 = vcmask 130048
    %v84 = vsel %vm82, %v73, 0
    %v87 = vsel %vm82, %v74, 0
    %89 = vmatprep.subr.mxu0 0.0
    %90 = vmatpush1.msra.mxu0 %v76
    %91 = vmatprep.subr.mxu0 0.0
    %92 = vmatpush1.msra.mxu0 %v77
    %93 = vmatprep.subr.mxu0 0.0
    %94 = vmatpush1.msra.mxu0 0.0
    %95 = vmatprep.subr.mxu0 0.0
    %96 = vmatpush1.msra.mxu0 0.0
    %97 = vmatprep.subr.mxu0 0.0
    %98 = vmatpush1.msra.mxu0 0.0
    %99 = vmatprep.subr.mxu0 0.0
    %100 = vmatpush1.msra.mxu0 0.0
    %101 = vmatprep.subr.mxu0 0.0
    %102 = vmatpush1.msra.mxu0 0.0
    %103 = vmatprep.subr.mxu0 0.0
    %104 = vmatpush1.msra.mxu0 0.0
    %105 = vmatprep.subr.mxu0 0.0
    %106 = vmatpush1.msra.mxu0 0.0
    %107 = vmatprep.subr.mxu0 0.0
    %108 = vmatpush1.msra.mxu0 0.0
    %109 = vmatprep.subr.mxu0 0.0
    %110 = vmatpush1.msra.mxu0 0.0
    %111 = vmatprep.subr.mxu0 0.0
    %112 = vmatpush1.msra.mxu0 0.0
    %113 = vmatprep.subr.mxu0 0.0
    %114 = vmatpush1.msra.mxu0 0.0
    %115 = vmatprep.subr.mxu0 0.0
    %116 = vmatpush1.msra.mxu0 0.0
    %117 = vmatprep.subr.mxu0 0.0
    %118 = vmatpush1.msra.mxu0 0.0
    %119 = vmatprep.subr.mxu0 0.0
    %120 = vmatpush1.msra.mxu0 0.0
    %121 = vmatprep.subr.mxu0 0.0
    %122 = vmatpush1.msra.mxu0 0.0
    %123 = vmatprep.subr.mxu0 0.0
    %124 = vmatpush1.msra.mxu0 0.0
    %125 = vmatprep.subr.mxu0 0.0
    %126 = vmatpush1.msra.mxu0 0.0
    %127 = vmatprep.subr.mxu0 0.0
    %128 = vmatpush1.msra.mxu0 0.0
    %129 = vmatprep.subr.mxu0 0.0
    %130 = vmatpush1.msra.mxu0 0.0
    %131 = vmatprep.subr.mxu0 0.0
    %132 = vmatpush1.msra.mxu0 0.0
    %133 = vmatprep.subr.mxu0 0.0
    %134 = vmatpush1.msra.mxu0 0.0
    %135 = vmatprep.subr.mxu0 0.0
    %136 = vmatpush1.msra.mxu0 0.0
    %137 = vmatprep.subr.mxu0 0.0
    %138 = vmatpush1.msra.mxu0 0.0
    %139 = vmatprep.subr.mxu0 0.0
    %140 = vmatpush1.msra.mxu0 0.0
    %141 = vmatprep.subr.mxu0 0.0
    %142 = vmatpush1.msra.mxu0 0.0
    %143 = vmatprep.subr.mxu0 0.0
    %144 = vmatpush1.msra.mxu0 0.0
    %145 = vmatprep.subr.mxu0 0.0
    %146 = vmatpush1.msra.mxu0 0.0
    %147 = vmatprep.subr.mxu0 0.0
    %148 = vmatpush1.msra.mxu0 0.0
    %149 = vmatprep.subr.mxu0 0.0
    %150 = vmatpush1.msra.mxu0 0.0
    %151 = vmatprep.subr.mxu0 0.0
    %152 = vmatpush1.msra.mxu0 0.0
    %153 = vmatprep.mubr.f32.mxu0 0.0
    %154 = vmatmul.mubr.f32.gmra.mrb[0].mxu0 %v84
    %v155 = vpop.f32.mrb[0].mxu0
    %v156 = vadd.f32 %v81, %v155
    %v157 = vpop.f32.mrb[0].mxu0
    %158 = vmatprep.mubr.f32.mxu0 0.0
    %159 = vmatmul.mubr.f32.gmra.mrb[0].mxu0 %v87
    %v160 = vpop.f32.mrb[0].mxu0
    %v161 = vadd.f32 %v81, %v160
    %v162 = vpop.f32.mrb[0].mxu0
    %163 = vdwg.mxu0
    %v164 = vmul.f32 %v156, 5.656854
    %v165 = vmul.f32 %v161, 5.656854
    %v166 = vlaneseq
    %v167 = vshrl.u32 %v166, 7
    %v168 = vadd.s32 %v167, 8
    %vm169 = vcmp.lt.s32.totalorder %v167, 0
    %v170 = vsub.s32 0, %v167
    %v171 = vsel %vm169, %v170, %v167
    %v172 = vshrl.u32 %v171, 1
    %v173 = vand.u32 %v171, 1
    %v174 = vsub.s32 0, %v173
    %v175 = vsel %vm169, %v174, %v173
    %vm176 = vcmp.lt.s32.totalorder %v168, 0
    %v177 = vsub.s32 0, %v168
    %v178 = vsel %vm176, %v177, %v168
    %v179 = vshrl.u32 %v178, 1
    %v180 = vand.u32 %v178, 1
    %v181 = vsub.s32 0, %v180
    %v182 = vsel %vm176, %v181, %v180
    %vm183 = vcmp.ne.s32.totalorder %v175, 0
    %vm184 = vcmp.ne.s32.totalorder %v182, 0
    %vm185 = vcmp.lt.s32.totalorder %v175, 0
    %vm186 = vcmp.lt.s32.totalorder %v182, 0
    %vm187 = vmand %vm185, %vm183
    %vm188 = vmand %vm186, %vm184
    %v189 = vadd.s32 %v175, 2
    %v190 = vadd.s32 %v182, 2
    %v191 = vsel %vm187, %v189, %v175
    %v192 = vsel %vm188, %v190, %v182
    %v193 = vlaneseq
    %v194 = vand.u32 %v193, 127
    %vm195 = vcmp.lt.s32.totalorder %v194, 0
    %v196 = vsub.s32 0, %v194
    %v197 = vsel %vm195, %v196, %v194
    %v198 = vshrl.u32 %v197, 1
    %v199 = vand.u32 %v197, 1
    %v200 = vsub.s32 0, %v199
    %v201 = vsel %vm195, %v200, %v199
    %vm202 = vcmp.ne.s32.totalorder %v201, 0
    %vm203 = vcmp.lt.s32.totalorder %v201, 0
    %vm204 = vmand %vm203, %vm202
    %v205 = vadd.s32 %v201, 2
    %v206 = vsel %vm204, %v205, %v201
    %vm207 = vcmp.eq.s32.totalorder %v191, %v206
    %vm208 = vcmp.eq.s32.totalorder %v192, %v206
    %v209 = vsel %vm207, 0.0, -1e+30
    %v210 = vsel %vm208, 0.0, -1e+30
    %v211 = vld [vmem:[#allocation6] sm:$0xff]
    %v212 = vld [vmem:[%s2] sm:$0xff]
    %v213 = vld [vmem:[%s2 + $0x8] sm:$0xff]
    %v214 = vld [vmem:[%s2 + $0x10] sm:$0xff]
    %v215 = vld [vmem:[%s2 + $0x18] sm:$0xff]
    %v216 = vlaneseq
    %v217 = vshrl.u32 %v216, 7
    %v218 = vsub.s32 0, %v217
    %v219 = vrot.slane %v211, %v218
    %vm220 = vcmask 261120
    %v222 = vsel %vm220, %v164, 0
    %v225 = vsel %vm220, %v165, 0
    %227 = vmatprep.subr.mxu0 0.0
    %228 = vmatpush1.msra.mxu0 %v212
    %229 = vmatprep.subr.mxu0 0.0
    %230 = vmatpush1.msra.mxu0 %v213
    %231 = vmatprep.subr.mxu0 0.0
    %232 = vmatpush1.msra.mxu0 %v214
    %233 = vmatprep.subr.mxu0 0.0
    %234 = vmatpush1.msra.mxu0 %v215
    %235 = vmatprep.subr.mxu0 0.0
    %236 = vmatpush1.msra.mxu0 0.0
    %237 = vmatprep.subr.mxu0 0.0
    %238 = vmatpush1.msra.mxu0 0.0
    %239 = vmatprep.subr.mxu0 0.0
    %240 = vmatpush1.msra.mxu0 0.0
    %241 = vmatprep.subr.mxu0 0.0
    %242 = vmatpush1.msra.mxu0 0.0
    %243 = vmatprep.subr.mxu0 0.0
    %244 = vmatpush1.msra.mxu0 0.0
    %245 = vmatprep.subr.mxu0 0.0
    %246 = vmatpush1.msra.mxu0 0.0
    %247 = vmatprep.subr.mxu0 0.0
    %248 = vmatpush1.msra.mxu0 0.0
    %249 = vmatprep.subr.mxu0 0.0
    %250 = vmatpush1.msra.mxu0 0.0
    %251 = vmatprep.subr.mxu0 0.0
    %252 = vmatpush1.msra.mxu0 0.0
    %253 = vmatprep.subr.mxu0 0.0
    %254 = vmatpush1.msra.mxu0 0.0
    %255 = vmatprep.subr.mxu0 0.0
    %256 = vmatpush1.msra.mxu0 0.0
    %257 = vmatprep.subr.mxu0 0.0
    %258 = vmatpush1.msra.mxu0 0.0
    %259 = vmatprep.subr.mxu0 0.0
    %260 = vmatpush1.msra.mxu0 0.0
    %261 = vmatprep.subr.mxu0 0.0
    %262 = vmatpush1.msra.mxu0 0.0
    %263 = vmatprep.subr.mxu0 0.0
    %264 = vmatpush1.msra.mxu0 0.0
    %265 = vmatprep.subr.mxu0 0.0
    %266 = vmatpush1.msra.mxu0 0.0
    %267 = vmatprep.subr.mxu0 0.0
    %268 = vmatpush1.msra.mxu0 0.0
    %269 = vmatprep.subr.mxu0 0.0
    %270 = vmatpush1.msra.mxu0 0.0
    %271 = vmatprep.subr.mxu0 0.0
    %272 = vmatpush1.msra.mxu0 0.0
    %273 = vmatprep.subr.mxu0 0.0
    %274 = vmatpush1.msra.mxu0 0.0
    %275 = vmatprep.subr.mxu0 0.0
    %276 = vmatpush1.msra.mxu0 0.0
    %277 = vmatprep.subr.mxu0 0.0
    %278 = vmatpush1.msra.mxu0 0.0
    %279 = vmatprep.subr.mxu0 0.0
    %280 = vmatpush1.msra.mxu0 0.0
    %281 = vmatprep.subr.mxu0 0.0
    %282 = vmatpush1.msra.mxu0 0.0
    %283 = vmatprep.subr.mxu0 0.0
    %284 = vmatpush1.msra.mxu0 0.0
    %285 = vmatprep.subr.mxu0 0.0
    %286 = vmatpush1.msra.mxu0 0.0
    %287 = vmatprep.subr.mxu0 0.0
    %288 = vmatpush1.msra.mxu0 0.0
    %289 = vmatprep.subr.mxu0 0.0
    %290 = vmatpush1.msra.mxu0 0.0
    %291 = vmatprep.mubr.f32.mxu0 0.0
    %292 = vmatmul.mubr.f32.gmra.mrb[0].mxu0 %v222
    %v293 = vpop.f32.mrb[0].mxu0
    %v294 = vadd.f32 %v219, %v293
    %v295 = vpop.f32.mrb[0].mxu0
    %296 = vmatprep.mubr.f32.mxu0 0.0
    %297 = vmatmul.mubr.f32.gmra.mrb[0].mxu0 %v225
    %v298 = vpop.f32.mrb[0].mxu0
    %v299 = vadd.f32 %v219, %v298
    %v300 = vpop.f32.mrb[0].mxu0
    %301 = vdwg.mxu0
    %v302 = vmul.f32 %v294, 0.25
    %v303 = vmul.f32 %v299, 0.25
    %306 = vrot.lane.b32.xlu0 %v294, 96
    %v307 = vpop.permute.xlu0 %306
    %308 = vrot.lane.b32.xlu0 %v299, 96
    %v309 = vpop.permute.xlu0 %308
    %v311 = vsel %vm82, %v302, 0
    %v314 = vsel %vm82, %v303, 0
    %v316 = vsel %vm82, %v307, 0
    %v318 = vsel %vm82, %v309, 0
    %320 = vmatprep.subr.mxu0 0.0
    %321 = vmatpush1.xpose.msra.mxu0 %v316
    %322 = vmatprep.subr.mxu0 0.0
    %323 = vmatpush1.xpose.msra.mxu0 %v318
    %324 = vmatprep.subr.mxu0 0.0
    %325 = vmatpush1.xpose.msra.mxu0 0.0
    %326 = vmatprep.subr.mxu0 0.0
    %327 = vmatpush1.xpose.msra.mxu0 0.0
    %328 = vmatprep.subr.mxu0 0.0
    %329 = vmatpush1.xpose.msra.mxu0 0.0
    %330 = vmatprep.subr.mxu0 0.0
    %331 = vmatpush1.xpose.msra.mxu0 0.0
    %332 = vmatprep.subr.mxu0 0.0
    %333 = vmatpush1.xpose.msra.mxu0 0.0
    %334 = vmatprep.subr.mxu0 0.0
    %335 = vmatpush1.xpose.msra.mxu0 0.0
    %336 = vmatprep.subr.mxu0 0.0
    %337 = vmatpush1.xpose.msra.mxu0 0.0
    %338 = vmatprep.subr.mxu0 0.0
    %339 = vmatpush1.xpose.msra.mxu0 0.0
    %340 = vmatprep.subr.mxu0 0.0
    %341 = vmatpush1.xpose.msra.mxu0 0.0
    %342 = vmatprep.subr.mxu0 0.0
    %343 = vmatpush1.xpose.msra.mxu0 0.0
    %344 = vmatprep.subr.mxu0 0.0
    %345 = vmatpush1.xpose.msra.mxu0 0.0
    %346 = vmatprep.subr.mxu0 0.0
    %347 = vmatpush1.xpose.msra.mxu0 0.0
    %348 = vmatprep.subr.mxu0 0.0
    %349 = vmatpush1.xpose.msra.mxu0 0.0
    %350 = vmatprep.subr.mxu0 0.0
    %351 = vmatpush1.xpose.msra.mxu0 0.0
    %352 = vmatprep.subr.mxu0 0.0
    %353 = vmatpush1.xpose.msra.mxu0 0.0
    %354 = vmatprep.subr.mxu0 0.0
    %355 = vmatpush1.xpose.msra.mxu0 0.0
    %356 = vmatprep.subr.mxu0 0.0
    %357 = vmatpush1.xpose.msra.mxu0 0.0
    %358 = vmatprep.subr.mxu0 0.0
    %359 = vmatpush1.xpose.msra.mxu0 0.0
    %360 = vmatprep.subr.mxu0 0.0
    %361 = vmatpush1.xpose.msra.mxu0 0.0
    %362 = vmatprep.subr.mxu0 0.0
    %363 = vmatpush1.xpose.msra.mxu0 0.0
    %364 = vmatprep.subr.mxu0 0.0
    %365 = vmatpush1.xpose.msra.mxu0 0.0
    %366 = vmatprep.subr.mxu0 0.0
    %367 = vmatpush1.xpose.msra.mxu0 0.0
    %368 = vmatprep.subr.mxu0 0.0
    %369 = vmatpush1.xpose.msra.mxu0 0.0
    %370 = vmatprep.subr.mxu0 0.0
    %371 = vmatpush1.xpose.msra.mxu0 0.0
    %372 = vmatprep.subr.mxu0 0.0
    %373 = vmatpush1.xpose.msra.mxu0 0.0
    %374 = vmatprep.subr.mxu0 0.0
    %375 = vmatpush1.xpose.msra.mxu0 0.0
    %376 = vmatprep.subr.mxu0 0.0
    %377 = vmatpush1.xpose.msra.mxu0 0.0
    %378 = vmatprep.subr.mxu0 0.0
    %379 = vmatpush1.xpose.msra.mxu0 0.0
    %380 = vmatprep.subr.mxu0 0.0
    %381 = vmatpush1.xpose.msra.mxu0 0.0
    %382 = vmatprep.subr.mxu0 0.0
    %383 = vmatpush1.xpose.msra.mxu0 0.0
    %384 = vmatprep.mubr.f32.mxu0 0.0
    %385 = vmatmul.mubr.f32.gmra.mrb[0].mxu0 %v311
    %v386 = vpop.f32.mrb[0].mxu0
    %v387 = vadd.f32 %v209, %v386
    %v388 = vpop.f32.mrb[0].mxu0
    %389 = vmatprep.mubr.f32.mxu0 0.0
    %390 = vmatmul.mubr.f32.gmra.mrb[0].mxu0 %v314
    %v391 = vpop.f32.mrb[0].mxu0
    %v392 = vadd.f32 %v210, %v391
    %v393 = vpop.f32.mrb[0].mxu0
    %394 = vdwg.mxu0
    %v395 = vsel %vm82, %v387, -inf
    %396 = vmax.xlane.f32.xlu0 %v395
    %v397 = vpop.xlane.xlu0 %396
    %v398 = vsel %vm82, %v392, -inf
    %399 = vmax.xlane.f32.xlu0 %v398
    %v400 = vpop.xlane.xlu0 %399
    %v401 = vsub.f32 %v387, %v397
    %v402 = vsub.f32 %v392, %v400
    %v403 = vmul.f32 %v401, 1.442695
    %v404 = vpow.pop %v403
    %v405 = vmul.f32 %v402, 1.442695
    %v406 = vpow.pop %v405
    %v407 = vsel %vm82, %v404, 0.0
    %408 = vadd.xlane.f32.xlu0 %v407
    %v409 = vpop.xlane.xlu0 %408
    %v410 = vsel %vm82, %v406, 0.0
    %411 = vadd.xlane.f32.xlu0 %v410
    %v412 = vpop.xlane.xlu0 %411
    %v413 = vrcp.pop %v409
    %v414 = vrcp.pop %v412
    %v415 = vmul.f32 %v404, %v413
    %v416 = vmul.f32 %v406, %v414
    %417 = vrot.lane.b32.xlu0 %v294, 64
    %v418 = vpop.permute.xlu0 %417
    %419 = vrot.lane.b32.xlu0 %v299, 64
    %v420 = vpop.permute.xlu0 %419
    %v424 = vsel %vm82, %v415, 0
    %v427 = vsel %vm82, %v416, 0
    %429 = vmatprep.subr.mxu0 0.0
    %430 = vmatpush1.msra.mxu0 %v418
    %431 = vmatprep.subr.mxu0 0.0
    %432 = vmatpush1.msra.mxu0 %v420
    %433 = vmatprep.subr.mxu0 0.0
    %434 = vmatpush1.msra.mxu0 0.0
    %435 = vmatprep.subr.mxu0 0.0
    %436 = vmatpush1.msra.mxu0 0.0
    %437 = vmatprep.subr.mxu0 0.0
    %438 = vmatpush1.msra.mxu0 0.0
    %439 = vmatprep.subr.mxu0 0.0
    %440 = vmatpush1.msra.mxu0 0.0
    %441 = vmatprep.subr.mxu0 0.0
    %442 = vmatpush1.msra.mxu0 0.0
    %443 = vmatprep.subr.mxu0 0.0
    %444 = vmatpush1.msra.mxu0 0.0
    %445 = vmatprep.subr.mxu0 0.0
    %446 = vmatpush1.msra.mxu0 0.0
    %447 = vmatprep.subr.mxu0 0.0
    %448 = vmatpush1.msra.mxu0 0.0
    %449 = vmatprep.subr.mxu0 0.0
    %450 = vmatpush1.msra.mxu0 0.0
    %451 = vmatprep.subr.mxu0 0.0
    %452 = vmatpush1.msra.mxu0 0.0
    %453 = vmatprep.subr.mxu0 0.0
    %454 = vmatpush1.msra.mxu0 0.0
    %455 = vmatprep.subr.mxu0 0.0
    %456 = vmatpush1.msra.mxu0 0.0
    %457 = vmatprep.subr.mxu0 0.0
    %458 = vmatpush1.msra.mxu0 0.0
    %459 = vmatprep.subr.mxu0 0.0
    %460 = vmatpush1.msra.mxu0 0.0
    %461 = vmatprep.subr.mxu0 0.0
    %462 = vmatpush1.msra.mxu0 0.0
    %463 = vmatprep.subr.mxu0 0.0
    %464 = vmatpush1.msra.mxu0 0.0
    %465 = vmatprep.subr.mxu0 0.0
    %466 = vmatpush1.msra.mxu0 0.0
    %467 = vmatprep.subr.mxu0 0.0
    %468 = vmatpush1.msra.mxu0 0.0
    %469 = vmatprep.subr.mxu0 0.0
    %470 = vmatpush1.msra.mxu0 0.0
    %471 = vmatprep.subr.mxu0 0.0
    %472 = vmatpush1.msra.mxu0 0.0
    %473 = vmatprep.subr.mxu0 0.0
    %474 = vmatpush1.msra.mxu0 0.0
    %475 = vmatprep.subr.mxu0 0.0
    %476 = vmatpush1.msra.mxu0 0.0
    %477 = vmatprep.subr.mxu0 0.0
    %478 = vmatpush1.msra.mxu0 0.0
    %479 = vmatprep.subr.mxu0 0.0
    %480 = vmatpush1.msra.mxu0 0.0
    %481 = vmatprep.subr.mxu0 0.0
    %482 = vmatpush1.msra.mxu0 0.0
    %483 = vmatprep.subr.mxu0 0.0
    %484 = vmatpush1.msra.mxu0 0.0
    %485 = vmatprep.subr.mxu0 0.0
    %486 = vmatpush1.msra.mxu0 0.0
    %487 = vmatprep.subr.mxu0 0.0
    %488 = vmatpush1.msra.mxu0 0.0
    %489 = vmatprep.subr.mxu0 0.0
    %490 = vmatpush1.msra.mxu0 0.0
    %491 = vmatprep.subr.mxu0 0.0
    %492 = vmatpush1.msra.mxu0 0.0
    %493 = vmatprep.mubr.f32.mxu0 0.0
    %494 = vmatmul.mubr.f32.gmra.mrb[0].mxu0 %v424
    %v495 = vpop.f32.mrb[0].mxu0
    %v496 = vadd.f32 0.0, %v495
    %v497 = vpop.f32.mrb[0].mxu0
    %498 = vmatprep.mubr.f32.mxu0 0.0
    %499 = vmatmul.mubr.f32.gmra.mrb[0].mxu0 %v427
    %v500 = vpop.f32.mrb[0].mxu0
    %v501 = vadd.f32 0.0, %v500
    %v502 = vpop.f32.mrb[0].mxu0
    %503 = vdwg.mxu0
    %504 = vrot.lane.b32.xlu0 %v302, 112
    %v505 = vpop.permute.xlu0 %504
    %506 = vrot.lane.b32.xlu0 %v303, 112
    %v507 = vpop.permute.xlu0 %506
    %508 = vrot.lane.b32.xlu0 %v294, 80
    %v509 = vpop.permute.xlu0 %508
    %510 = vrot.lane.b32.xlu0 %v299, 80
    %v511 = vpop.permute.xlu0 %510
    %v512 = vsel %vm82, %v505, 0
    %v514 = vsel %vm82, %v507, 0
    %v516 = vsel %vm82, %v509, 0
    %v518 = vsel %vm82, %v511, 0
    %520 = vmatprep.subr.mxu0 0.0
    %521 = vmatpush1.xpose.msra.mxu0 %v516
    %522 = vmatprep.subr.mxu0 0.0
    %523 = vmatpush1.xpose.msra.mxu0 %v518
    %524 = vmatprep.subr.mxu0 0.0
    %525 = vmatpush1.xpose.msra.mxu0 0.0
    %526 = vmatprep.subr.mxu0 0.0
    %527 = vmatpush1.xpose.msra.mxu0 0.0
    %528 = vmatprep.subr.mxu0 0.0
    %529 = vmatpush1.xpose.msra.mxu0 0.0
    %530 = vmatprep.subr.mxu0 0.0
    %531 = vmatpush1.xpose.msra.mxu0 0.0
    %532 = vmatprep.subr.mxu0 0.0
    %533 = vmatpush1.xpose.msra.mxu0 0.0
    %534 = vmatprep.subr.mxu0 0.0
    %535 = vmatpush1.xpose.msra.mxu0 0.0
    %536 = vmatprep.subr.mxu0 0.0
    %537 = vmatpush1.xpose.msra.mxu0 0.0
    %538 = vmatprep.subr.mxu0 0.0
    %539 = vmatpush1.xpose.msra.mxu0 0.0
    %540 = vmatprep.subr.mxu0 0.0
    %541 = vmatpush1.xpose.msra.mxu0 0.0
    %542 = vmatprep.subr.mxu0 0.0
    %543 = vmatpush1.xpose.msra.mxu0 0.0
    %544 = vmatprep.subr.mxu0 0.0
    %545 = vmatpush1.xpose.msra.mxu0 0.0
    %546 = vmatprep.subr.mxu0 0.0
    %547 = vmatpush1.xpose.msra.mxu0 0.0
    %548 = vmatprep.subr.mxu0 0.0
    %549 = vmatpush1.xpose.msra.mxu0 0.0
    %550 = vmatprep.subr.mxu0 0.0
    %551 = vmatpush1.xpose.msra.mxu0 0.0
    %552 = vmatprep.subr.mxu0 0.0
    %553 = vmatpush1.xpose.msra.mxu0 0.0
    %554 = vmatprep.subr.mxu0 0.0
    %555 = vmatpush1.xpose.msra.mxu0 0.0
    %556 = vmatprep.subr.mxu0 0.0
    %557 = vmatpush1.xpose.msra.mxu0 0.0
    %558 = vmatprep.subr.mxu0 0.0
    %559 = vmatpush1.xpose.msra.mxu0 0.0
    %560 = vmatprep.subr.mxu0 0.0
    %561 = vmatpush1.xpose.msra.mxu0 0.0
    %562 = vmatprep.subr.mxu0 0.0
    %563 = vmatpush1.xpose.msra.mxu0 0.0
    %564 = vmatprep.subr.mxu0 0.0
    %565 = vmatpush1.xpose.msra.mxu0 0.0
    %566 = vmatprep.subr.mxu0 0.0
    %567 = vmatpush1.xpose.msra.mxu0 0.0
    %568 = vmatprep.subr.mxu0 0.0
    %569 = vmatpush1.xpose.msra.mxu0 0.0
    %570 = vmatprep.subr.mxu0 0.0
    %571 = vmatpush1.xpose.msra.mxu0 0.0
    %572 = vmatprep.subr.mxu0 0.0
    %573 = vmatpush1.xpose.msra.mxu0 0.0
    %574 = vmatprep.subr.mxu0 0.0
    %575 = vmatpush1.xpose.msra.mxu0 0.0
    %576 = vmatprep.subr.mxu0 0.0
    %577 = vmatpush1.xpose.msra.mxu0 0.0
    %578 = vmatprep.subr.mxu0 0.0
    %579 = vmatpush1.xpose.msra.mxu0 0.0
    %580 = vmatprep.subr.mxu0 0.0
    %581 = vmatpush1.xpose.msra.mxu0 0.0
    %582 = vmatprep.subr.mxu0 0.0
    %583 = vmatpush1.xpose.msra.mxu0 0.0
    %584 = vmatprep.mubr.f32.mxu0 0.0
    %585 = vmatmul.mubr.f32.gmra.mrb[0].mxu0 %v512
    %v586 = vpop.f32.mrb[0].mxu0
    %v587 = vadd.f32 %v209, %v586
    %v588 = vpop.f32.mrb[0].mxu0
    %589 = vmatprep.mubr.f32.mxu0 0.0
    %590 = vmatmul.mubr.f32.gmra.mrb[0].mxu0 %v514
    %v591 = vpop.f32.mrb[0].mxu0
    %v592 = vadd.f32 %v210, %v591
    %v593 = vpop.f32.mrb[0].mxu0
    %594 = vdwg.mxu0
    %v595 = vsel %vm82, %v587, -inf
    %596 = vmax.xlane.f32.xlu0 %v595
    %v597 = vpop.xlane.xlu0 %596
    %v598 = vsel %vm82, %v592, -inf
    %599 = vmax.xlane.f32.xlu0 %v598
    %v600 = vpop.xlane.xlu0 %599
    %v601 = vsub.f32 %v587, %v597
    %v602 = vsub.f32 %v592, %v600
    %v603 = vmul.f32 %v601, 1.442695
    %v604 = vpow.pop %v603
    %v605 = vmul.f32 %v602, 1.442695
    %v606 = vpow.pop %v605
    %v607 = vsel %vm82, %v604, 0.0
    %608 = vadd.xlane.f32.xlu0 %v607
    %v609 = vpop.xlane.xlu0 %608
    %v610 = vsel %vm82, %v606, 0.0
    %611 = vadd.xlane.f32.xlu0 %v610
    %v612 = vpop.xlane.xlu0 %611
    %v613 = vrcp.pop %v609
    %v614 = vrcp.pop %v612
    %v615 = vmul.f32 %v604, %v613
    %v616 = vmul.f32 %v606, %v614
    %617 = vrot.lane.b32.xlu0 %v294, 48
    %v618 = vpop.permute.xlu0 %617
    %619 = vrot.lane.b32.xlu0 %v299, 48
    %v620 = vpop.permute.xlu0 %619
    %v624 = vsel %vm82, %v615, 0
    %v627 = vsel %vm82, %v616, 0
    %629 = vmatprep.subr.mxu0 0.0
    %630 = vmatpush1.msra.mxu0 %v618
    %631 = vmatprep.subr.mxu0 0.0
    %632 = vmatpush1.msra.mxu0 %v620
    %633 = vmatprep.subr.mxu0 0.0
    %634 = vmatpush1.msra.mxu0 0.0
    %635 = vmatprep.subr.mxu0 0.0
    %636 = vmatpush1.msra.mxu0 0.0
    %637 = vmatprep.subr.mxu0 0.0
    %638 = vmatpush1.msra.mxu0 0.0
    %639 = vmatprep.subr.mxu0 0.0
    %640 = vmatpush1.msra.mxu0 0.0
    %641 = vmatprep.subr.mxu0 0.0
    %642 = vmatpush1.msra.mxu0 0.0
    %643 = vmatprep.subr.mxu0 0.0
    %644 = vmatpush1.msra.mxu0 0.0
    %645 = vmatprep.subr.mxu0 0.0
    %646 = vmatpush1.msra.mxu0 0.0
    %647 = vmatprep.subr.mxu0 0.0
    %648 = vmatpush1.msra.mxu0 0.0
    %649 = vmatprep.subr.mxu0 0.0
    %650 = vmatpush1.msra.mxu0 0.0
    %651 = vmatprep.subr.mxu0 0.0
    %652 = vmatpush1.msra.mxu0 0.0
    %653 = vmatprep.subr.mxu0 0.0
    %654 = vmatpush1.msra.mxu0 0.0
    %655 = vmatprep.subr.mxu0 0.0
    %656 = vmatpush1.msra.mxu0 0.0
    %657 = vmatprep.subr.mxu0 0.0
    %658 = vmatpush1.msra.mxu0 0.0
    %659 = vmatprep.subr.mxu0 0.0
    %660 = vmatpush1.msra.mxu0 0.0
    %661 = vmatprep.subr.mxu0 0.0
    %662 = vmatpush1.msra.mxu0 0.0
    %663 = vmatprep.subr.mxu0 0.0
    %664 = vmatpush1.msra.mxu0 0.0
    %665 = vmatprep.subr.mxu0 0.0
    %666 = vmatpush1.msra.mxu0 0.0
    %667 = vmatprep.subr.mxu0 0.0
    %668 = vmatpush1.msra.mxu0 0.0
    %669 = vmatprep.subr.mxu0 0.0
    %670 = vmatpush1.msra.mxu0 0.0
    %671 = vmatprep.subr.mxu0 0.0
    %672 = vmatpush1.msra.mxu0 0.0
    %673 = vmatprep.subr.mxu0 0.0
    %674 = vmatpush1.msra.mxu0 0.0
    %675 = vmatprep.subr.mxu0 0.0
    %676 = vmatpush1.msra.mxu0 0.0
    %677 = vmatprep.subr.mxu0 0.0
    %678 = vmatpush1.msra.mxu0 0.0
    %679 = vmatprep.subr.mxu0 0.0
    %680 = vmatpush1.msra.mxu0 0.0
    %681 = vmatprep.subr.mxu0 0.0
    %682 = vmatpush1.msra.mxu0 0.0
    %683 = vmatprep.subr.mxu0 0.0
    %684 = vmatpush1.msra.mxu0 0.0
    %685 = vmatprep.subr.mxu0 0.0
    %686 = vmatpush1.msra.mxu0 0.0
    %687 = vmatprep.subr.mxu0 0.0
    %688 = vmatpush1.msra.mxu0 0.0
    %689 = vmatprep.subr.mxu0 0.0
    %690 = vmatpush1.msra.mxu0 0.0
    %691 = vmatprep.subr.mxu0 0.0
    %692 = vmatpush1.msra.mxu0 0.0
    %693 = vmatprep.mubr.f32.mxu0 0.0
    %694 = vmatmul.mubr.f32.gmra.mrb[0].mxu0 %v624
    %v695 = vpop.f32.mrb[0].mxu0
    %v696 = vadd.f32 0.0, %v695
    %v697 = vpop.f32.mrb[0].mxu0
    %698 = vmatprep.mubr.f32.mxu0 0.0
    %699 = vmatmul.mubr.f32.gmra.mrb[0].mxu0 %v627
    %v700 = vpop.f32.mrb[0].mxu0
    %v701 = vadd.f32 0.0, %v700
    %v702 = vpop.f32.mrb[0].mxu0
    %703 = vdwg.mxu0
    %706 = vrot.lane.b32.xlu0 %v696, 16
    %v707 = vpop.permute.xlu0 %706
    %708 = vrot.lane.b32.xlu0 %v701, 16
    %v709 = vpop.permute.xlu0 %708
    %v712 = vsel %vm82, %v496, %v707
    %v713 = vsel %vm82, %v501, %v709
    %v714 = vld [vmem:[%s3] sm:$0xff]
    %v715 = vld [vmem:[%s3 + $0x8] sm:$0xff]
    %v716 = vld [vmem:[%s3 + $0x10] sm:$0xff]
    %v717 = vld [vmem:[%s3 + $0x18] sm:$0xff]
    %v718 = vlaneseq
    %v719 = vshrl.u32 %v718, 7
    %v720 = vsub.s32 1, %v719
    %v721 = vrot.slane %v211, %v720
    %v723 = vsel %vm220, %v712, 0
    %v726 = vsel %vm220, %v713, 0
    %728 = vmatprep.subr.mxu0 0.0
    %729 = vmatpush1.msra.mxu0 %v714
    %730 = vmatprep.subr.mxu0 0.0
    %731 = vmatpush1.msra.mxu0 %v715
    %732 = vmatprep.subr.mxu0 0.0
    %733 = vmatpush1.msra.mxu0 %v716
    %734 = vmatprep.subr.mxu0 0.0
    %735 = vmatpush1.msra.mxu0 %v717
    %736 = vmatprep.subr.mxu0 0.0
    %737 = vmatpush1.msra.mxu0 0.0
    %738 = vmatprep.subr.mxu0 0.0
    %739 = vmatpush1.msra.mxu0 0.0
    %740 = vmatprep.subr.mxu0 0.0
    %741 = vmatpush1.msra.mxu0 0.0
    %742 = vmatprep.subr.mxu0 0.0
    %743 = vmatpush1.msra.mxu0 0.0
    %744 = vmatprep.subr.mxu0 0.0
    %745 = vmatpush1.msra.mxu0 0.0
    %746 = vmatprep.subr.mxu0 0.0
    %747 = vmatpush1.msra.mxu0 0.0
    %748 = vmatprep.subr.mxu0 0.0
    %749 = vmatpush1.msra.mxu0 0.0
    %750 = vmatprep.subr.mxu0 0.0
    %751 = vmatpush1.msra.mxu0 0.0
    %752 = vmatprep.subr.mxu0 0.0
    %753 = vmatpush1.msra.mxu0 0.0
    %754 = vmatprep.subr.mxu0 0.0
    %755 = vmatpush1.msra.mxu0 0.0
    %756 = vmatprep.subr.mxu0 0.0
    %757 = vmatpush1.msra.mxu0 0.0
    %758 = vmatprep.subr.mxu0 0.0
    %759 = vmatpush1.msra.mxu0 0.0
    %760 = vmatprep.subr.mxu0 0.0
    %761 = vmatpush1.msra.mxu0 0.0
    %762 = vmatprep.subr.mxu0 0.0
    %763 = vmatpush1.msra.mxu0 0.0
    %764 = vmatprep.subr.mxu0 0.0
    %765 = vmatpush1.msra.mxu0 0.0
    %766 = vmatprep.subr.mxu0 0.0
    %767 = vmatpush1.msra.mxu0 0.0
    %768 = vmatprep.subr.mxu0 0.0
    %769 = vmatpush1.msra.mxu0 0.0
    %770 = vmatprep.subr.mxu0 0.0
    %771 = vmatpush1.msra.mxu0 0.0
    %772 = vmatprep.subr.mxu0 0.0
    %773 = vmatpush1.msra.mxu0 0.0
    %774 = vmatprep.subr.mxu0 0.0
    %775 = vmatpush1.msra.mxu0 0.0
    %776 = vmatprep.subr.mxu0 0.0
    %777 = vmatpush1.msra.mxu0 0.0
    %778 = vmatprep.subr.mxu0 0.0
    %779 = vmatpush1.msra.mxu0 0.0
    %780 = vmatprep.subr.mxu0 0.0
    %781 = vmatpush1.msra.mxu0 0.0
    %782 = vmatprep.subr.mxu0 0.0
    %783 = vmatpush1.msra.mxu0 0.0
    %784 = vmatprep.subr.mxu0 0.0
    %785 = vmatpush1.msra.mxu0 0.0
    %786 = vmatprep.subr.mxu0 0.0
    %787 = vmatpush1.msra.mxu0 0.0
    %788 = vmatprep.subr.mxu0 0.0
    %789 = vmatpush1.msra.mxu0 0.0
    %790 = vmatprep.subr.mxu0 0.0
    %791 = vmatpush1.msra.mxu0 0.0
    %792 = vmatprep.mubr.f32.mxu0 0.0
    %793 = vmatmul.mubr.f32.gmra.mrb[0].mxu0 %v723
    %v794 = vpop.f32.mrb[0].mxu0
    %v795 = vadd.f32 %v721, %v794
    %v796 = vpop.f32.mrb[0].mxu0
    %797 = vmatprep.mubr.f32.mxu0 0.0
    %798 = vmatmul.mubr.f32.gmra.mrb[0].mxu0 %v726
    %v799 = vpop.f32.mrb[0].mxu0
    %v800 = vadd.f32 %v721, %v799
    %v801 = vpop.f32.mrb[0].mxu0
    %802 = vdwg.mxu0
    %v803 = vadd.f32 %v164, %v795
    %v804 = vadd.f32 %v165, %v800
    %v805 = vsel %vm220, %v803, 0.0
    %806 = vadd.xlane.f32.xlu0 %v805
    %v807 = vpop.xlane.xlu0 %806
    %v808 = vsel %vm220, %v804, 0.0
    %809 = vadd.xlane.f32.xlu0 %v808
    %v810 = vpop.xlane.xlu0 %809
    %v811 = vrcp.pop 32.0
    %v812 = vmul.f32 %v807, %v811
    %v813 = vmul.f32 %v810, %v811
    %v814 = vsub.f32 %v803, %v812
    %v815 = vsub.f32 %v804, %v813
    %v816 = vmul.f32 %v814, %v814
    %v817 = vmul.f32 %v815, %v815
    %v818 = vsel %vm220, %v816, 0.0
    %819 = vadd.xlane.f32.xlu0 %v818
    %v820 = vpop.xlane.xlu0 %819
    %v821 = vsel %vm220, %v817, 0.0
    %822 = vadd.xlane.f32.xlu0 %v821
    %v823 = vpop.xlane.xlu0 %822
    %v824 = vmul.f32 %v820, %v811
    %v825 = vmul.f32 %v823, %v811
    %v826 = vadd.f32 %v824, 1e-05
    %v827 = vadd.f32 %v825, 1e-05
    %v828 = vrsqrt.pop %v826
    %v829 = vrsqrt.pop %v827
    %v830 = vmul.f32 %v814, %v828
    %v831 = vmul.f32 %v815, %v829
    %v832 = vlaneseq
    %v833 = vshrl.u32 %v832, 7
    %v834 = vsub.s32 4, %v833
    %v835 = vrot.slane %v211, %v834
    %v836 = vmul.f32 %v830, %v835
    %v837 = vmul.f32 %v831, %v835
    %v838 = vlaneseq
    %v839 = vshrl.u32 %v838, 7
    %v840 = vsub.s32 5, %v839
    %v841 = vrot.slane %v211, %v840
    %v842 = vadd.f32 %v836, %v841
    %v843 = vadd.f32 %v837, %v841
    %v844 = vld [vmem:[%s4] sm:$0xff]
    %v845 = vld [vmem:[%s4 + $0x8] sm:$0xff]
    %v846 = vld [vmem:[%s4 + $0x10] sm:$0xff]
    %v847 = vld [vmem:[%s4 + $0x18] sm:$0xff]
    %v848 = vlaneseq
    %v849 = vshrl.u32 %v848, 7
    %v850 = vsub.s32 2, %v849
    %v851 = vrot.slane %v211, %v850
    %v853 = vsel %vm220, %v842, 0
    %v856 = vsel %vm220, %v843, 0
    %858 = vmatprep.subr.mxu0 0.0
    %859 = vmatpush1.msra.mxu0 %v844
    %860 = vmatprep.subr.mxu0 0.0
    %861 = vmatpush1.msra.mxu0 %v845
    %862 = vmatprep.subr.mxu0 0.0
    %863 = vmatpush1.msra.mxu0 %v846
    %864 = vmatprep.subr.mxu0 0.0
    %865 = vmatpush1.msra.mxu0 %v847
    %866 = vmatprep.subr.mxu0 0.0
    %867 = vmatpush1.msra.mxu0 0.0
    %868 = vmatprep.subr.mxu0 0.0
    %869 = vmatpush1.msra.mxu0 0.0
    %870 = vmatprep.subr.mxu0 0.0
    %871 = vmatpush1.msra.mxu0 0.0
    %872 = vmatprep.subr.mxu0 0.0
    %873 = vmatpush1.msra.mxu0 0.0
    %874 = vmatprep.subr.mxu0 0.0
    %875 = vmatpush1.msra.mxu0 0.0
    %876 = vmatprep.subr.mxu0 0.0
    %877 = vmatpush1.msra.mxu0 0.0
    %878 = vmatprep.subr.mxu0 0.0
    %879 = vmatpush1.msra.mxu0 0.0
    %880 = vmatprep.subr.mxu0 0.0
    %881 = vmatpush1.msra.mxu0 0.0
    %882 = vmatprep.subr.mxu0 0.0
    %883 = vmatpush1.msra.mxu0 0.0
    %884 = vmatprep.subr.mxu0 0.0
    %885 = vmatpush1.msra.mxu0 0.0
    %886 = vmatprep.subr.mxu0 0.0
    %887 = vmatpush1.msra.mxu0 0.0
    %888 = vmatprep.subr.mxu0 0.0
    %889 = vmatpush1.msra.mxu0 0.0
    %890 = vmatprep.subr.mxu0 0.0
    %891 = vmatpush1.msra.mxu0 0.0
    %892 = vmatprep.subr.mxu0 0.0
    %893 = vmatpush1.msra.mxu0 0.0
    %894 = vmatprep.subr.mxu0 0.0
    %895 = vmatpush1.msra.mxu0 0.0
    %896 = vmatprep.subr.mxu0 0.0
    %897 = vmatpush1.msra.mxu0 0.0
    %898 = vmatprep.subr.mxu0 0.0
    %899 = vmatpush1.msra.mxu0 0.0
    %900 = vmatprep.subr.mxu0 0.0
    %901 = vmatpush1.msra.mxu0 0.0
    %902 = vmatprep.subr.mxu0 0.0
    %903 = vmatpush1.msra.mxu0 0.0
    %904 = vmatprep.subr.mxu0 0.0
    %905 = vmatpush1.msra.mxu0 0.0
    %906 = vmatprep.subr.mxu0 0.0
    %907 = vmatpush1.msra.mxu0 0.0
    %908 = vmatprep.subr.mxu0 0.0
    %909 = vmatpush1.msra.mxu0 0.0
    %910 = vmatprep.subr.mxu0 0.0
    %911 = vmatpush1.msra.mxu0 0.0
    %912 = vmatprep.subr.mxu0 0.0
    %913 = vmatpush1.msra.mxu0 0.0
    %914 = vmatprep.subr.mxu0 0.0
    %915 = vmatpush1.msra.mxu0 0.0
    %916 = vmatprep.subr.mxu0 0.0
    %917 = vmatpush1.msra.mxu0 0.0
    %918 = vmatprep.subr.mxu0 0.0
    %919 = vmatpush1.msra.mxu0 0.0
    %920 = vmatprep.subr.mxu0 0.0
    %921 = vmatpush1.msra.mxu0 0.0
    %922 = vmatprep.mubr.f32.mxu0 0.0
    %923 = vmatmul.mubr.f32.gmra.mrb[0].mxu0 %v853
    %v924 = vpop.f32.mrb[0].mxu0
    %v925 = vadd.f32 %v851, %v924
    %v926 = vpop.f32.mrb[0].mxu0
    %927 = vmatprep.mubr.f32.mxu0 0.0
    %928 = vmatmul.mubr.f32.gmra.mrb[0].mxu0 %v856
    %v929 = vpop.f32.mrb[0].mxu0
    %v930 = vadd.f32 %v851, %v929
    %v931 = vpop.f32.mrb[0].mxu0
    %932 = vdwg.mxu0
    %v933 = vmax.f32 %v925, 0.0
    %v934 = vmax.f32 %v930, 0.0
    %v935 = vld [vmem:[%s5] sm:$0xff]
    %v936 = vld [vmem:[%s5 + $0x8] sm:$0xff]
    %v937 = vld [vmem:[%s5 + $0x10] sm:$0xff]
    %v938 = vld [vmem:[%s5 + $0x18] sm:$0xff]
    %v939 = vld [vmem:[%s5 + $0x20] sm:$0xff]
    %v940 = vld [vmem:[%s5 + $0x28] sm:$0xff]
    %v941 = vld [vmem:[%s5 + $0x30] sm:$0xff]
    %v942 = vld [vmem:[%s5 + $0x38] sm:$0xff]
    %v943 = vlaneseq
    %v944 = vshrl.u32 %v943, 7
    %v945 = vsub.s32 3, %v944
    %v946 = vrot.slane %v211, %v945
    %vm947 = vcmask 523264
    %v949 = vsel %vm947, %v933, 0
    %v952 = vsel %vm947, %v934, 0
    %954 = vmatprep.subr.mxu0 0.0
    %955 = vmatpush1.msra.mxu0 %v935
    %956 = vmatprep.subr.mxu0 0.0
    %957 = vmatpush1.msra.mxu0 %v936
    %958 = vmatprep.subr.mxu0 0.0
    %959 = vmatpush1.msra.mxu0 %v937
    %960 = vmatprep.subr.mxu0 0.0
    %961 = vmatpush1.msra.mxu0 %v938
    %962 = vmatprep.subr.mxu0 0.0
    %963 = vmatpush1.msra.mxu0 %v939
    %964 = vmatprep.subr.mxu0 0.0
    %965 = vmatpush1.msra.mxu0 %v940
    %966 = vmatprep.subr.mxu0 0.0
    %967 = vmatpush1.msra.mxu0 %v941
    %968 = vmatprep.subr.mxu0 0.0
    %969 = vmatpush1.msra.mxu0 %v942
    %970 = vmatprep.subr.mxu0 0.0
    %971 = vmatpush1.msra.mxu0 0.0
    %972 = vmatprep.subr.mxu0 0.0
    %973 = vmatpush1.msra.mxu0 0.0
    %974 = vmatprep.subr.mxu0 0.0
    %975 = vmatpush1.msra.mxu0 0.0
    %976 = vmatprep.subr.mxu0 0.0
    %977 = vmatpush1.msra.mxu0 0.0
    %978 = vmatprep.subr.mxu0 0.0
    %979 = vmatpush1.msra.mxu0 0.0
    %980 = vmatprep.subr.mxu0 0.0
    %981 = vmatpush1.msra.mxu0 0.0
    %982 = vmatprep.subr.mxu0 0.0
    %983 = vmatpush1.msra.mxu0 0.0
    %984 = vmatprep.subr.mxu0 0.0
    %985 = vmatpush1.msra.mxu0 0.0
    %986 = vmatprep.subr.mxu0 0.0
    %987 = vmatpush1.msra.mxu0 0.0
    %988 = vmatprep.subr.mxu0 0.0
    %989 = vmatpush1.msra.mxu0 0.0
    %990 = vmatprep.subr.mxu0 0.0
    %991 = vmatpush1.msra.mxu0 0.0
    %992 = vmatprep.subr.mxu0 0.0
    %993 = vmatpush1.msra.mxu0 0.0
    %994 = vmatprep.subr.mxu0 0.0
    %995 = vmatpush1.msra.mxu0 0.0
    %996 = vmatprep.subr.mxu0 0.0
    %997 = vmatpush1.msra.mxu0 0.0
    %998 = vmatprep.subr.mxu0 0.0
    %999 = vmatpush1.msra.mxu0 0.0
    %1000 = vmatprep.subr.mxu0 0.0
    %1001 = vmatpush1.msra.mxu0 0.0
    %1002 = vmatprep.subr.mxu0 0.0
    %1003 = vmatpush1.msra.mxu0 0.0
    %1004 = vmatprep.subr.mxu0 0.0
    %1005 = vmatpush1.msra.mxu0 0.0
    %1006 = vmatprep.subr.mxu0 0.0
    %1007 = vmatpush1.msra.mxu0 0.0
    %1008 = vmatprep.subr.mxu0 0.0
    %1009 = vmatpush1.msra.mxu0 0.0
    %1010 = vmatprep.subr.mxu0 0.0
    %1011 = vmatpush1.msra.mxu0 0.0
    %1012 = vmatprep.subr.mxu0 0.0
    %1013 = vmatpush1.msra.mxu0 0.0
    %1014 = vmatprep.subr.mxu0 0.0
    %1015 = vmatpush1.msra.mxu0 0.0
    %1016 = vmatprep.subr.mxu0 0.0
    %1017 = vmatpush1.msra.mxu0 0.0
    %1018 = vmatprep.mubr.f32.mxu0 0.0
    %1019 = vmatmul.mubr.f32.gmra.mrb[0].mxu0 %v949
    %v1020 = vpop.f32.mrb[0].mxu0
    %v1021 = vadd.f32 %v946, %v1020
    %v1022 = vpop.f32.mrb[0].mxu0
    %1023 = vmatprep.mubr.f32.mxu0 0.0
    %1024 = vmatmul.mubr.f32.gmra.mrb[0].mxu0 %v952
    %v1025 = vpop.f32.mrb[0].mxu0
    %v1026 = vadd.f32 %v946, %v1025
    %v1027 = vpop.f32.mrb[0].mxu0
    %1028 = vdwg.mxu0
    %v1029 = vadd.f32 %v842, %v1021
    %v1030 = vadd.f32 %v843, %v1026
    %v1031 = vsel %vm220, %v1029, 0.0
    %1032 = vadd.xlane.f32.xlu0 %v1031
    %v1033 = vpop.xlane.xlu0 %1032
    %v1034 = vsel %vm220, %v1030, 0.0
    %1035 = vadd.xlane.f32.xlu0 %v1034
    %v1036 = vpop.xlane.xlu0 %1035
    %v1037 = vmul.f32 %v1033, %v811
    %v1038 = vmul.f32 %v1036, %v811
    %v1039 = vsub.f32 %v1029, %v1037
    %v1040 = vsub.f32 %v1030, %v1038
    %v1041 = vmul.f32 %v1039, %v1039
    %v1042 = vmul.f32 %v1040, %v1040
    %v1043 = vsel %vm220, %v1041, 0.0
    %1044 = vadd.xlane.f32.xlu0 %v1043
    %v1045 = vpop.xlane.xlu0 %1044
    %v1046 = vsel %vm220, %v1042, 0.0
    %1047 = vadd.xlane.f32.xlu0 %v1046
    %v1048 = vpop.xlane.xlu0 %1047
    %v1049 = vmul.f32 %v1045, %v811
    %v1050 = vmul.f32 %v1048, %v811
    %v1051 = vadd.f32 %v1049, 1e-05
    %v1052 = vadd.f32 %v1050, 1e-05
    %v1053 = vrsqrt.pop %v1051
    %v1054 = vrsqrt.pop %v1052
    %v1055 = vmul.f32 %v1039, %v1053
    %v1056 = vmul.f32 %v1040, %v1054
    %v1057 = vlaneseq
    %v1058 = vshrl.u32 %v1057, 7
    %v1059 = vsub.s32 6, %v1058
    %v1060 = vrot.slane %v211, %v1059
    %v1061 = vmul.f32 %v1055, %v1060
    %v1062 = vmul.f32 %v1056, %v1060
    %v1063 = vlaneseq
    %v1064 = vshrl.u32 %v1063, 7
    %v1065 = vsub.s32 7, %v1064
    %v1066 = vrot.slane %v211, %v1065
    %v1067 = vadd.f32 %v1061, %v1066
    %v1068 = vadd.f32 %v1062, %v1066
    %s1069 = scalar_lea.vmem [#allocation6], 8
    %v1070 = vld [vmem:[%s1069] sm:$0xff]
    %s1071 = scalar_lea.vmem %s2, 32
    %v1072 = vld [vmem:[%s1071] sm:$0xff]
    %v1073 = vld [vmem:[%s1071 + $0x8] sm:$0xff]
    %v1074 = vld [vmem:[%s1071 + $0x10] sm:$0xff]
    %v1075 = vld [vmem:[%s1071 + $0x18] sm:$0xff]
    %v1076 = vlaneseq
    %v1077 = vshrl.u32 %v1076, 7
    %v1078 = vsub.s32 0, %v1077
    %v1079 = vrot.slane %v1070, %v1078
    %v1081 = vsel %vm220, %v1067, 0
    %v1084 = vsel %vm220, %v1068, 0
    %1086 = vmatprep.subr.mxu0 0.0
    %1087 = vmatpush1.msra.mxu0 %v1072
    %1088 = vmatprep.subr.mxu0 0.0
    %1089 = vmatpush1.msra.mxu0 %v1073
    %1090 = vmatprep.subr.mxu0 0.0
    %1091 = vmatpush1.msra.mxu0 %v1074
    %1092 = vmatprep.subr.mxu0 0.0
    %1093 = vmatpush1.msra.mxu0 %v1075
    %1094 = vmatprep.subr.mxu0 0.0
    %1095 = vmatpush1.msra.mxu0 0.0
    %1096 = vmatprep.subr.mxu0 0.0
    %1097 = vmatpush1.msra.mxu0 0.0
    %1098 = vmatprep.subr.mxu0 0.0
    %1099 = vmatpush1.msra.mxu0 0.0
    %1100 = vmatprep.subr.mxu0 0.0
    %1101 = vmatpush1.msra.mxu0 0.0
    %1102 = vmatprep.subr.mxu0 0.0
    %1103 = vmatpush1.msra.mxu0 0.0
    %1104 = vmatprep.subr.mxu0 0.0
    %1105 = vmatpush1.msra.mxu0 0.0
    %1106 = vmatprep.subr.mxu0 0.0
    %1107 = vmatpush1.msra.mxu0 0.0
    %1108 = vmatprep.subr.mxu0 0.0
    %1109 = vmatpush1.msra.mxu0 0.0
    %1110 = vmatprep.subr.mxu0 0.0
    %1111 = vmatpush1.msra.mxu0 0.0
    %1112 = vmatprep.subr.mxu0 0.0
    %1113 = vmatpush1.msra.mxu0 0.0
    %1114 = vmatprep.subr.mxu0 0.0
    %1115 = vmatpush1.msra.mxu0 0.0
    %1116 = vmatprep.subr.mxu0 0.0
    %1117 = vmatpush1.msra.mxu0 0.0
    %1118 = vmatprep.subr.mxu0 0.0
    %1119 = vmatpush1.msra.mxu0 0.0
    %1120 = vmatprep.subr.mxu0 0.0
    %1121 = vmatpush1.msra.mxu0 0.0
    %1122 = vmatprep.subr.mxu0 0.0
    %1123 = vmatpush1.msra.mxu0 0.0
    %1124 = vmatprep.subr.mxu0 0.0
    %1125 = vmatpush1.msra.mxu0 0.0
    %1126 = vmatprep.subr.mxu0 0.0
    %1127 = vmatpush1.msra.mxu0 0.0
    %1128 = vmatprep.subr.mxu0 0.0
    %1129 = vmatpush1.msra.mxu0 0.0
    %1130 = vmatprep.subr.mxu0 0.0
    %1131 = vmatpush1.msra.mxu0 0.0
    %1132 = vmatprep.subr.mxu0 0.0
    %1133 = vmatpush1.msra.mxu0 0.0
    %1134 = vmatprep.subr.mxu0 0.0
    %1135 = vmatpush1.msra.mxu0 0.0
    %1136 = vmatprep.subr.mxu0 0.0
    %1137 = vmatpush1.msra.mxu0 0.0
    %1138 = vmatprep.subr.mxu0 0.0
    %1139 = vmatpush1.msra.mxu0 0.0
    %1140 = vmatprep.subr.mxu0 0.0
    %1141 = vmatpush1.msra.mxu0 0.0
    %1142 = vmatprep.subr.mxu0 0.0
    %1143 = vmatpush1.msra.mxu0 0.0
    %1144 = vmatprep.subr.mxu0 0.0
    %1145 = vmatpush1.msra.mxu0 0.0
    %1146 = vmatprep.subr.mxu0 0.0
    %1147 = vmatpush1.msra.mxu0 0.0
    %1148 = vmatprep.subr.mxu0 0.0
    %1149 = vmatpush1.msra.mxu0 0.0
    %1150 = vmatprep.mubr.f32.mxu0 0.0
    %1151 = vmatmul.mubr.f32.gmra.mrb[0].mxu0 %v1081
    %v1152 = vpop.f32.mrb[0].mxu0
    %v1153 = vadd.f32 %v1079, %v1152
    %v1154 = vpop.f32.mrb[0].mxu0
    %1155 = vmatprep.mubr.f32.mxu0 0.0
    %1156 = vmatmul.mubr.f32.gmra.mrb[0].mxu0 %v1084
    %v1157 = vpop.f32.mrb[0].mxu0
    %v1158 = vadd.f32 %v1079, %v1157
    %v1159 = vpop.f32.mrb[0].mxu0
    %1160 = vdwg.mxu0
    %v1161 = vmul.f32 %v1153, 0.25
    %v1162 = vmul.f32 %v1158, 0.25
    %1165 = vrot.lane.b32.xlu0 %v1153, 96
    %v1166 = vpop.permute.xlu0 %1165
    %1167 = vrot.lane.b32.xlu0 %v1158, 96
    %v1168 = vpop.permute.xlu0 %1167
    %v1170 = vsel %vm82, %v1161, 0
    %v1173 = vsel %vm82, %v1162, 0
    %v1175 = vsel %vm82, %v1166, 0
    %v1177 = vsel %vm82, %v1168, 0
    %1179 = vmatprep.subr.mxu0 0.0
    %1180 = vmatpush1.xpose.msra.mxu0 %v1175
    %1181 = vmatprep.subr.mxu0 0.0
    %1182 = vmatpush1.xpose.msra.mxu0 %v1177
    %1183 = vmatprep.subr.mxu0 0.0
    %1184 = vmatpush1.xpose.msra.mxu0 0.0
    %1185 = vmatprep.subr.mxu0 0.0
    %1186 = vmatpush1.xpose.msra.mxu0 0.0
    %1187 = vmatprep.subr.mxu0 0.0
    %1188 = vmatpush1.xpose.msra.mxu0 0.0
    %1189 = vmatprep.subr.mxu0 0.0
    %1190 = vmatpush1.xpose.msra.mxu0 0.0
    %1191 = vmatprep.subr.mxu0 0.0
    %1192 = vmatpush1.xpose.msra.mxu0 0.0
    %1193 = vmatprep.subr.mxu0 0.0
    %1194 = vmatpush1.xpose.msra.mxu0 0.0
    %1195 = vmatprep.subr.mxu0 0.0
    %1196 = vmatpush1.xpose.msra.mxu0 0.0
    %1197 = vmatprep.subr.mxu0 0.0
    %1198 = vmatpush1.xpose.msra.mxu0 0.0
    %1199 = vmatprep.subr.mxu0 0.0
    %1200 = vmatpush1.xpose.msra.mxu0 0.0
    %1201 = vmatprep.subr.mxu0 0.0
    %1202 = vmatpush1.xpose.msra.mxu0 0.0
    %1203 = vmatprep.subr.mxu0 0.0
    %1204 = vmatpush1.xpose.msra.mxu0 0.0
    %1205 = vmatprep.subr.mxu0 0.0
    %1206 = vmatpush1.xpose.msra.mxu0 0.0
    %1207 = vmatprep.subr.mxu0 0.0
    %1208 = vmatpush1.xpose.msra.mxu0 0.0
    %1209 = vmatprep.subr.mxu0 0.0
    %1210 = vmatpush1.xpose.msra.mxu0 0.0
    %1211 = vmatprep.subr.mxu0 0.0
    %1212 = vmatpush1.xpose.msra.mxu0 0.0
    %1213 = vmatprep.subr.mxu0 0.0
    %1214 = vmatpush1.xpose.msra.mxu0 0.0
    %1215 = vmatprep.subr.mxu0 0.0
    %1216 = vmatpush1.xpose.msra.mxu0 0.0
    %1217 = vmatprep.subr.mxu0 0.0
    %1218 = vmatpush1.xpose.msra.mxu0 0.0
    %1219 = vmatprep.subr.mxu0 0.0
    %1220 = vmatpush1.xpose.msra.mxu0 0.0
    %1221 = vmatprep.subr.mxu0 0.0
    %1222 = vmatpush1.xpose.msra.mxu0 0.0
    %1223 = vmatprep.subr.mxu0 0.0
    %1224 = vmatpush1.xpose.msra.mxu0 0.0
    %1225 = vmatprep.subr.mxu0 0.0
    %1226 = vmatpush1.xpose.msra.mxu0 0.0
    %1227 = vmatprep.subr.mxu0 0.0
    %1228 = vmatpush1.xpose.msra.mxu0 0.0
    %1229 = vmatprep.subr.mxu0 0.0
    %1230 = vmatpush1.xpose.msra.mxu0 0.0
    %1231 = vmatprep.subr.mxu0 0.0
    %1232 = vmatpush1.xpose.msra.mxu0 0.0
    %1233 = vmatprep.subr.mxu0 0.0
    %1234 = vmatpush1.xpose.msra.mxu0 0.0
    %1235 = vmatprep.subr.mxu0 0.0
    %1236 = vmatpush1.xpose.msra.mxu0 0.0
    %1237 = vmatprep.subr.mxu0 0.0
    %1238 = vmatpush1.xpose.msra.mxu0 0.0
    %1239 = vmatprep.subr.mxu0 0.0
    %1240 = vmatpush1.xpose.msra.mxu0 0.0
    %1241 = vmatprep.subr.mxu0 0.0
    %1242 = vmatpush1.xpose.msra.mxu0 0.0
    %1243 = vmatprep.mubr.f32.mxu0 0.0
    %1244 = vmatmul.mubr.f32.gmra.mrb[0].mxu0 %v1170
    %v1245 = vpop.f32.mrb[0].mxu0
    %v1246 = vadd.f32 %v209, %v1245
    %v1247 = vpop.f32.mrb[0].mxu0
    %1248 = vmatprep.mubr.f32.mxu0 0.0
    %1249 = vmatmul.mubr.f32.gmra.mrb[0].mxu0 %v1173
    %v1250 = vpop.f32.mrb[0].mxu0
    %v1251 = vadd.f32 %v210, %v1250
    %v1252 = vpop.f32.mrb[0].mxu0
    %1253 = vdwg.mxu0
    %v1254 = vsel %vm82, %v1246, -inf
    %1255 = vmax.xlane.f32.xlu0 %v1254
    %v1256 = vpop.xlane.xlu0 %1255
    %v1257 = vsel %vm82, %v1251, -inf
    %1258 = vmax.xlane.f32.xlu0 %v1257
    %v1259 = vpop.xlane.xlu0 %1258
    %v1260 = vsub.f32 %v1246, %v1256
    %v1261 = vsub.f32 %v1251, %v1259
    %v1262 = vmul.f32 %v1260, 1.442695
    %v1263 = vpow.pop %v1262
    %v1264 = vmul.f32 %v1261, 1.442695
    %v1265 = vpow.pop %v1264
    %v1266 = vsel %vm82, %v1263, 0.0
    %1267 = vadd.xlane.f32.xlu0 %v1266
    %v1268 = vpop.xlane.xlu0 %1267
    %v1269 = vsel %vm82, %v1265, 0.0
    %1270 = vadd.xlane.f32.xlu0 %v1269
    %v1271 = vpop.xlane.xlu0 %1270
    %v1272 = vrcp.pop %v1268
    %v1273 = vrcp.pop %v1271
    %v1274 = vmul.f32 %v1263, %v1272
    %v1275 = vmul.f32 %v1265, %v1273
    %1276 = vrot.lane.b32.xlu0 %v1153, 64
    %v1277 = vpop.permute.xlu0 %1276
    %1278 = vrot.lane.b32.xlu0 %v1158, 64
    %v1279 = vpop.permute.xlu0 %1278
    %v1283 = vsel %vm82, %v1274, 0
    %v1286 = vsel %vm82, %v1275, 0
    %1288 = vmatprep.subr.mxu0 0.0
    %1289 = vmatpush1.msra.mxu0 %v1277
    %1290 = vmatprep.subr.mxu0 0.0
    %1291 = vmatpush1.msra.mxu0 %v1279
    %1292 = vmatprep.subr.mxu0 0.0
    %1293 = vmatpush1.msra.mxu0 0.0
    %1294 = vmatprep.subr.mxu0 0.0
    %1295 = vmatpush1.msra.mxu0 0.0
    %1296 = vmatprep.subr.mxu0 0.0
    %1297 = vmatpush1.msra.mxu0 0.0
    %1298 = vmatprep.subr.mxu0 0.0
    %1299 = vmatpush1.msra.mxu0 0.0
    %1300 = vmatprep.subr.mxu0 0.0
    %1301 = vmatpush1.msra.mxu0 0.0
    %1302 = vmatprep.subr.mxu0 0.0
    %1303 = vmatpush1.msra.mxu0 0.0
    %1304 = vmatprep.subr.mxu0 0.0
    %1305 = vmatpush1.msra.mxu0 0.0
    %1306 = vmatprep.subr.mxu0 0.0
    %1307 = vmatpush1.msra.mxu0 0.0
    %1308 = vmatprep.subr.mxu0 0.0
    %1309 = vmatpush1.msra.mxu0 0.0
    %1310 = vmatprep.subr.mxu0 0.0
    %1311 = vmatpush1.msra.mxu0 0.0
    %1312 = vmatprep.subr.mxu0 0.0
    %1313 = vmatpush1.msra.mxu0 0.0
    %1314 = vmatprep.subr.mxu0 0.0
    %1315 = vmatpush1.msra.mxu0 0.0
    %1316 = vmatprep.subr.mxu0 0.0
    %1317 = vmatpush1.msra.mxu0 0.0
    %1318 = vmatprep.subr.mxu0 0.0
    %1319 = vmatpush1.msra.mxu0 0.0
    %1320 = vmatprep.subr.mxu0 0.0
    %1321 = vmatpush1.msra.mxu0 0.0
    %1322 = vmatprep.subr.mxu0 0.0
    %1323 = vmatpush1.msra.mxu0 0.0
    %1324 = vmatprep.subr.mxu0 0.0
    %1325 = vmatpush1.msra.mxu0 0.0
    %1326 = vmatprep.subr.mxu0 0.0
    %1327 = vmatpush1.msra.mxu0 0.0
    %1328 = vmatprep.subr.mxu0 0.0
    %1329 = vmatpush1.msra.mxu0 0.0
    %1330 = vmatprep.subr.mxu0 0.0
    %1331 = vmatpush1.msra.mxu0 0.0
    %1332 = vmatprep.subr.mxu0 0.0
    %1333 = vmatpush1.msra.mxu0 0.0
    %1334 = vmatprep.subr.mxu0 0.0
    %1335 = vmatpush1.msra.mxu0 0.0
    %1336 = vmatprep.subr.mxu0 0.0
    %1337 = vmatpush1.msra.mxu0 0.0
    %1338 = vmatprep.subr.mxu0 0.0
    %1339 = vmatpush1.msra.mxu0 0.0
    %1340 = vmatprep.subr.mxu0 0.0
    %1341 = vmatpush1.msra.mxu0 0.0
    %1342 = vmatprep.subr.mxu0 0.0
    %1343 = vmatpush1.msra.mxu0 0.0
    %1344 = vmatprep.subr.mxu0 0.0
    %1345 = vmatpush1.msra.mxu0 0.0
    %1346 = vmatprep.subr.mxu0 0.0
    %1347 = vmatpush1.msra.mxu0 0.0
    %1348 = vmatprep.subr.mxu0 0.0
    %1349 = vmatpush1.msra.mxu0 0.0
    %1350 = vmatprep.subr.mxu0 0.0
    %1351 = vmatpush1.msra.mxu0 0.0
    %1352 = vmatprep.mubr.f32.mxu0 0.0
    %1353 = vmatmul.mubr.f32.gmra.mrb[0].mxu0 %v1283
    %v1354 = vpop.f32.mrb[0].mxu0
    %v1355 = vadd.f32 0.0, %v1354
    %v1356 = vpop.f32.mrb[0].mxu0
    %1357 = vmatprep.mubr.f32.mxu0 0.0
    %1358 = vmatmul.mubr.f32.gmra.mrb[0].mxu0 %v1286
    %v1359 = vpop.f32.mrb[0].mxu0
    %v1360 = vadd.f32 0.0, %v1359
    %v1361 = vpop.f32.mrb[0].mxu0
    %1362 = vdwg.mxu0
    %1363 = vrot.lane.b32.xlu0 %v1161, 112
    %v1364 = vpop.permute.xlu0 %1363
    %1365 = vrot.lane.b32.xlu0 %v1162, 112
    %v1366 = vpop.permute.xlu0 %1365
    %1367 = vrot.lane.b32.xlu0 %v1153, 80
    %v1368 = vpop.permute.xlu0 %1367
    %1369 = vrot.lane.b32.xlu0 %v1158, 80
    %v1370 = vpop.permute.xlu0 %1369
    %v1371 = vsel %vm82, %v1364, 0
    %v1373 = vsel %vm82, %v1366, 0
    %v1375 = vsel %vm82, %v1368, 0
    %v1377 = vsel %vm82, %v1370, 0
    %1379 = vmatprep.subr.mxu0 0.0
    %1380 = vmatpush1.xpose.msra.mxu0 %v1375
    %1381 = vmatprep.subr.mxu0 0.0
    %1382 = vmatpush1.xpose.msra.mxu0 %v1377
    %1383 = vmatprep.subr.mxu0 0.0
    %1384 = vmatpush1.xpose.msra.mxu0 0.0
    %1385 = vmatprep.subr.mxu0 0.0
    %1386 = vmatpush1.xpose.msra.mxu0 0.0
    %1387 = vmatprep.subr.mxu0 0.0
    %1388 = vmatpush1.xpose.msra.mxu0 0.0
    %1389 = vmatprep.subr.mxu0 0.0
    %1390 = vmatpush1.xpose.msra.mxu0 0.0
    %1391 = vmatprep.subr.mxu0 0.0
    %1392 = vmatpush1.xpose.msra.mxu0 0.0
    %1393 = vmatprep.subr.mxu0 0.0
    %1394 = vmatpush1.xpose.msra.mxu0 0.0
    %1395 = vmatprep.subr.mxu0 0.0
    %1396 = vmatpush1.xpose.msra.mxu0 0.0
    %1397 = vmatprep.subr.mxu0 0.0
    %1398 = vmatpush1.xpose.msra.mxu0 0.0
    %1399 = vmatprep.subr.mxu0 0.0
    %1400 = vmatpush1.xpose.msra.mxu0 0.0
    %1401 = vmatprep.subr.mxu0 0.0
    %1402 = vmatpush1.xpose.msra.mxu0 0.0
    %1403 = vmatprep.subr.mxu0 0.0
    %1404 = vmatpush1.xpose.msra.mxu0 0.0
    %1405 = vmatprep.subr.mxu0 0.0
    %1406 = vmatpush1.xpose.msra.mxu0 0.0
    %1407 = vmatprep.subr.mxu0 0.0
    %1408 = vmatpush1.xpose.msra.mxu0 0.0
    %1409 = vmatprep.subr.mxu0 0.0
    %1410 = vmatpush1.xpose.msra.mxu0 0.0
    %1411 = vmatprep.subr.mxu0 0.0
    %1412 = vmatpush1.xpose.msra.mxu0 0.0
    %1413 = vmatprep.subr.mxu0 0.0
    %1414 = vmatpush1.xpose.msra.mxu0 0.0
    %1415 = vmatprep.subr.mxu0 0.0
    %1416 = vmatpush1.xpose.msra.mxu0 0.0
    %1417 = vmatprep.subr.mxu0 0.0
    %1418 = vmatpush1.xpose.msra.mxu0 0.0
    %1419 = vmatprep.subr.mxu0 0.0
    %1420 = vmatpush1.xpose.msra.mxu0 0.0
    %1421 = vmatprep.subr.mxu0 0.0
    %1422 = vmatpush1.xpose.msra.mxu0 0.0
    %1423 = vmatprep.subr.mxu0 0.0
    %1424 = vmatpush1.xpose.msra.mxu0 0.0
    %1425 = vmatprep.subr.mxu0 0.0
    %1426 = vmatpush1.xpose.msra.mxu0 0.0
    %1427 = vmatprep.subr.mxu0 0.0
    %1428 = vmatpush1.xpose.msra.mxu0 0.0
    %1429 = vmatprep.subr.mxu0 0.0
    %1430 = vmatpush1.xpose.msra.mxu0 0.0
    %1431 = vmatprep.subr.mxu0 0.0
    %1432 = vmatpush1.xpose.msra.mxu0 0.0
    %1433 = vmatprep.subr.mxu0 0.0
    %1434 = vmatpush1.xpose.msra.mxu0 0.0
    %1435 = vmatprep.subr.mxu0 0.0
    %1436 = vmatpush1.xpose.msra.mxu0 0.0
    %1437 = vmatprep.subr.mxu0 0.0
    %1438 = vmatpush1.xpose.msra.mxu0 0.0
    %1439 = vmatprep.subr.mxu0 0.0
    %1440 = vmatpush1.xpose.msra.mxu0 0.0
    %1441 = vmatprep.subr.mxu0 0.0
    %1442 = vmatpush1.xpose.msra.mxu0 0.0
    %1443 = vmatprep.mubr.f32.mxu0 0.0
    %1444 = vmatmul.mubr.f32.gmra.mrb[0].mxu0 %v1371
    %v1445 = vpop.f32.mrb[0].mxu0
    %v1446 = vadd.f32 %v209, %v1445
    %v1447 = vpop.f32.mrb[0].mxu0
    %1448 = vmatprep.mubr.f32.mxu0 0.0
    %1449 = vmatmul.mubr.f32.gmra.mrb[0].mxu0 %v1373
    %v1450 = vpop.f32.mrb[0].mxu0
    %v1451 = vadd.f32 %v210, %v1450
    %v1452 = vpop.f32.mrb[0].mxu0
    %1453 = vdwg.mxu0
    %v1454 = vsel %vm82, %v1446, -inf
    %1455 = vmax.xlane.f32.xlu0 %v1454
    %v1456 = vpop.xlane.xlu0 %1455
    %v1457 = vsel %vm82, %v1451, -inf
    %1458 = vmax.xlane.f32.xlu0 %v1457
    %v1459 = vpop.xlane.xlu0 %1458
    %v1460 = vsub.f32 %v1446, %v1456
    %v1461 = vsub.f32 %v1451, %v1459
    %v1462 = vmul.f32 %v1460, 1.442695
    %v1463 = vpow.pop %v1462
    %v1464 = vmul.f32 %v1461, 1.442695
    %v1465 = vpow.pop %v1464
    %v1466 = vsel %vm82, %v1463, 0.0
    %1467 = vadd.xlane.f32.xlu0 %v1466
    %v1468 = vpop.xlane.xlu0 %1467
    %v1469 = vsel %vm82, %v1465, 0.0
    %1470 = vadd.xlane.f32.xlu0 %v1469
    %v1471 = vpop.xlane.xlu0 %1470
    %v1472 = vrcp.pop %v1468
    %v1473 = vrcp.pop %v1471
    %v1474 = vmul.f32 %v1463, %v1472
    %v1475 = vmul.f32 %v1465, %v1473
    %1476 = vrot.lane.b32.xlu0 %v1153, 48
    %v1477 = vpop.permute.xlu0 %1476
    %1478 = vrot.lane.b32.xlu0 %v1158, 48
    %v1479 = vpop.permute.xlu0 %1478
    %v1483 = vsel %vm82, %v1474, 0
    %v1486 = vsel %vm82, %v1475, 0
    %1488 = vmatprep.subr.mxu0 0.0
    %1489 = vmatpush1.msra.mxu0 %v1477
    %1490 = vmatprep.subr.mxu0 0.0
    %1491 = vmatpush1.msra.mxu0 %v1479
    %1492 = vmatprep.subr.mxu0 0.0
    %1493 = vmatpush1.msra.mxu0 0.0
    %1494 = vmatprep.subr.mxu0 0.0
    %1495 = vmatpush1.msra.mxu0 0.0
    %1496 = vmatprep.subr.mxu0 0.0
    %1497 = vmatpush1.msra.mxu0 0.0
    %1498 = vmatprep.subr.mxu0 0.0
    %1499 = vmatpush1.msra.mxu0 0.0
    %1500 = vmatprep.subr.mxu0 0.0
    %1501 = vmatpush1.msra.mxu0 0.0
    %1502 = vmatprep.subr.mxu0 0.0
    %1503 = vmatpush1.msra.mxu0 0.0
    %1504 = vmatprep.subr.mxu0 0.0
    %1505 = vmatpush1.msra.mxu0 0.0
    %1506 = vmatprep.subr.mxu0 0.0
    %1507 = vmatpush1.msra.mxu0 0.0
    %1508 = vmatprep.subr.mxu0 0.0
    %1509 = vmatpush1.msra.mxu0 0.0
    %1510 = vmatprep.subr.mxu0 0.0
    %1511 = vmatpush1.msra.mxu0 0.0
    %1512 = vmatprep.subr.mxu0 0.0
    %1513 = vmatpush1.msra.mxu0 0.0
    %1514 = vmatprep.subr.mxu0 0.0
    %1515 = vmatpush1.msra.mxu0 0.0
    %1516 = vmatprep.subr.mxu0 0.0
    %1517 = vmatpush1.msra.mxu0 0.0
    %1518 = vmatprep.subr.mxu0 0.0
    %1519 = vmatpush1.msra.mxu0 0.0
    %1520 = vmatprep.subr.mxu0 0.0
    %1521 = vmatpush1.msra.mxu0 0.0
    %1522 = vmatprep.subr.mxu0 0.0
    %1523 = vmatpush1.msra.mxu0 0.0
    %1524 = vmatprep.subr.mxu0 0.0
    %1525 = vmatpush1.msra.mxu0 0.0
    %1526 = vmatprep.subr.mxu0 0.0
    %1527 = vmatpush1.msra.mxu0 0.0
    %1528 = vmatprep.subr.mxu0 0.0
    %1529 = vmatpush1.msra.mxu0 0.0
    %1530 = vmatprep.subr.mxu0 0.0
    %1531 = vmatpush1.msra.mxu0 0.0
    %1532 = vmatprep.subr.mxu0 0.0
    %1533 = vmatpush1.msra.mxu0 0.0
    %1534 = vmatprep.subr.mxu0 0.0
    %1535 = vmatpush1.msra.mxu0 0.0
    %1536 = vmatprep.subr.mxu0 0.0
    %1537 = vmatpush1.msra.mxu0 0.0
    %1538 = vmatprep.subr.mxu0 0.0
    %1539 = vmatpush1.msra.mxu0 0.0
    %1540 = vmatprep.subr.mxu0 0.0
    %1541 = vmatpush1.msra.mxu0 0.0
    %1542 = vmatprep.subr.mxu0 0.0
    %1543 = vmatpush1.msra.mxu0 0.0
    %1544 = vmatprep.subr.mxu0 0.0
    %1545 = vmatpush1.msra.mxu0 0.0
    %1546 = vmatprep.subr.mxu0 0.0
    %1547 = vmatpush1.msra.mxu0 0.0
    %1548 = vmatprep.subr.mxu0 0.0
    %1549 = vmatpush1.msra.mxu0 0.0
    %1550 = vmatprep.subr.mxu0 0.0
    %1551 = vmatpush1.msra.mxu0 0.0
    %1552 = vmatprep.mubr.f32.mxu0 0.0
    %1553 = vmatmul.mubr.f32.gmra.mrb[0].mxu0 %v1483
    %v1554 = vpop.f32.mrb[0].mxu0
    %v1555 = vadd.f32 0.0, %v1554
    %v1556 = vpop.f32.mrb[0].mxu0
    %1557 = vmatprep.mubr.f32.mxu0 0.0
    %1558 = vmatmul.mubr.f32.gmra.mrb[0].mxu0 %v1486
    %v1559 = vpop.f32.mrb[0].mxu0
    %v1560 = vadd.f32 0.0, %v1559
    %v1561 = vpop.f32.mrb[0].mxu0
    %1562 = vdwg.mxu0
    %1565 = vrot.lane.b32.xlu0 %v1555, 16
    %v1566 = vpop.permute.xlu0 %1565
    %1567 = vrot.lane.b32.xlu0 %v1560, 16
    %v1568 = vpop.permute.xlu0 %1567
    %v1571 = vsel %vm82, %v1355, %v1566
    %v1572 = vsel %vm82, %v1360, %v1568
    %s1573 = scalar_lea.vmem %s3, 32
    %v1574 = vld [vmem:[%s1573] sm:$0xff]
    %v1575 = vld [vmem:[%s1573 + $0x8] sm:$0xff]
    %v1576 = vld [vmem:[%s1573 + $0x10] sm:$0xff]
    %v1577 = vld [vmem:[%s1573 + $0x18] sm:$0xff]
    %v1578 = vlaneseq
    %v1579 = vshrl.u32 %v1578, 7
    %v1580 = vsub.s32 1, %v1579
    %v1581 = vrot.slane %v1070, %v1580
    %v1583 = vsel %vm220, %v1571, 0
    %v1586 = vsel %vm220, %v1572, 0
    %1588 = vmatprep.subr.mxu0 0.0
    %1589 = vmatpush1.msra.mxu0 %v1574
    %1590 = vmatprep.subr.mxu0 0.0
    %1591 = vmatpush1.msra.mxu0 %v1575
    %1592 = vmatprep.subr.mxu0 0.0
    %1593 = vmatpush1.msra.mxu0 %v1576
    %1594 = vmatprep.subr.mxu0 0.0
    %1595 = vmatpush1.msra.mxu0 %v1577
    %1596 = vmatprep.subr.mxu0 0.0
    %1597 = vmatpush1.msra.mxu0 0.0
    %1598 = vmatprep.subr.mxu0 0.0
    %1599 = vmatpush1.msra.mxu0 0.0
    %1600 = vmatprep.subr.mxu0 0.0
    %1601 = vmatpush1.msra.mxu0 0.0
    %1602 = vmatprep.subr.mxu0 0.0
    %1603 = vmatpush1.msra.mxu0 0.0
    %1604 = vmatprep.subr.mxu0 0.0
    %1605 = vmatpush1.msra.mxu0 0.0
    %1606 = vmatprep.subr.mxu0 0.0
    %1607 = vmatpush1.msra.mxu0 0.0
    %1608 = vmatprep.subr.mxu0 0.0
    %1609 = vmatpush1.msra.mxu0 0.0
    %1610 = vmatprep.subr.mxu0 0.0
    %1611 = vmatpush1.msra.mxu0 0.0
    %1612 = vmatprep.subr.mxu0 0.0
    %1613 = vmatpush1.msra.mxu0 0.0
    %1614 = vmatprep.subr.mxu0 0.0
    %1615 = vmatpush1.msra.mxu0 0.0
    %1616 = vmatprep.subr.mxu0 0.0
    %1617 = vmatpush1.msra.mxu0 0.0
    %1618 = vmatprep.subr.mxu0 0.0
    %1619 = vmatpush1.msra.mxu0 0.0
    %1620 = vmatprep.subr.mxu0 0.0
    %1621 = vmatpush1.msra.mxu0 0.0
    %1622 = vmatprep.subr.mxu0 0.0
    %1623 = vmatpush1.msra.mxu0 0.0
    %1624 = vmatprep.subr.mxu0 0.0
    %1625 = vmatpush1.msra.mxu0 0.0
    %1626 = vmatprep.subr.mxu0 0.0
    %1627 = vmatpush1.msra.mxu0 0.0
    %1628 = vmatprep.subr.mxu0 0.0
    %1629 = vmatpush1.msra.mxu0 0.0
    %1630 = vmatprep.subr.mxu0 0.0
    %1631 = vmatpush1.msra.mxu0 0.0
    %1632 = vmatprep.subr.mxu0 0.0
    %1633 = vmatpush1.msra.mxu0 0.0
    %1634 = vmatprep.subr.mxu0 0.0
    %1635 = vmatpush1.msra.mxu0 0.0
    %1636 = vmatprep.subr.mxu0 0.0
    %1637 = vmatpush1.msra.mxu0 0.0
    %1638 = vmatprep.subr.mxu0 0.0
    %1639 = vmatpush1.msra.mxu0 0.0
    %1640 = vmatprep.subr.mxu0 0.0
    %1641 = vmatpush1.msra.mxu0 0.0
    %1642 = vmatprep.subr.mxu0 0.0
    %1643 = vmatpush1.msra.mxu0 0.0
    %1644 = vmatprep.subr.mxu0 0.0
    %1645 = vmatpush1.msra.mxu0 0.0
    %1646 = vmatprep.subr.mxu0 0.0
    %1647 = vmatpush1.msra.mxu0 0.0
    %1648 = vmatprep.subr.mxu0 0.0
    %1649 = vmatpush1.msra.mxu0 0.0
    %1650 = vmatprep.subr.mxu0 0.0
    %1651 = vmatpush1.msra.mxu0 0.0
    %1652 = vmatprep.mubr.f32.mxu0 0.0
    %1653 = vmatmul.mubr.f32.gmra.mrb[0].mxu0 %v1583
    %v1654 = vpop.f32.mrb[0].mxu0
    %v1655 = vadd.f32 %v1581, %v1654
    %v1656 = vpop.f32.mrb[0].mxu0
    %1657 = vmatprep.mubr.f32.mxu0 0.0
    %1658 = vmatmul.mubr.f32.gmra.mrb[0].mxu0 %v1586
    %v1659 = vpop.f32.mrb[0].mxu0
    %v1660 = vadd.f32 %v1581, %v1659
    %v1661 = vpop.f32.mrb[0].mxu0
    %1662 = vdwg.mxu0
    %v1663 = vadd.f32 %v1067, %v1655
    %v1664 = vadd.f32 %v1068, %v1660
    %v1665 = vsel %vm220, %v1663, 0.0
    %1666 = vadd.xlane.f32.xlu0 %v1665
    %v1667 = vpop.xlane.xlu0 %1666
    %v1668 = vsel %vm220, %v1664, 0.0
    %1669 = vadd.xlane.f32.xlu0 %v1668
    %v1670 = vpop.xlane.xlu0 %1669
    %v1671 = vmul.f32 %v1667, %v811
    %v1672 = vmul.f32 %v1670, %v811
    %v1673 = vsub.f32 %v1663, %v1671
    %v1674 = vsub.f32 %v1664, %v1672
    %v1675 = vmul.f32 %v1673, %v1673
    %v1676 = vmul.f32 %v1674, %v1674
    %v1677 = vsel %vm220, %v1675, 0.0
    %1678 = vadd.xlane.f32.xlu0 %v1677
    %v1679 = vpop.xlane.xlu0 %1678
    %v1680 = vsel %vm220, %v1676, 0.0
    %1681 = vadd.xlane.f32.xlu0 %v1680
    %v1682 = vpop.xlane.xlu0 %1681
    %v1683 = vmul.f32 %v1679, %v811
    %v1684 = vmul.f32 %v1682, %v811
    %v1685 = vadd.f32 %v1683, 1e-05
    %v1686 = vadd.f32 %v1684, 1e-05
    %v1687 = vrsqrt.pop %v1685
    %v1688 = vrsqrt.pop %v1686
    %v1689 = vmul.f32 %v1673, %v1687
    %v1690 = vmul.f32 %v1674, %v1688
    %v1691 = vlaneseq
    %v1692 = vshrl.u32 %v1691, 7
    %v1693 = vsub.s32 4, %v1692
    %v1694 = vrot.slane %v1070, %v1693
    %v1695 = vmul.f32 %v1689, %v1694
    %v1696 = vmul.f32 %v1690, %v1694
    %v1697 = vlaneseq
    %v1698 = vshrl.u32 %v1697, 7
    %v1699 = vsub.s32 5, %v1698
    %v1700 = vrot.slane %v1070, %v1699
    %v1701 = vadd.f32 %v1695, %v1700
    %v1702 = vadd.f32 %v1696, %v1700
    %s1703 = scalar_lea.vmem %s4, 32
    %v1704 = vld [vmem:[%s1703] sm:$0xff]
    %v1705 = vld [vmem:[%s1703 + $0x8] sm:$0xff]
    %v1706 = vld [vmem:[%s1703 + $0x10] sm:$0xff]
    %v1707 = vld [vmem:[%s1703 + $0x18] sm:$0xff]
    %v1708 = vlaneseq
    %v1709 = vshrl.u32 %v1708, 7
    %v1710 = vsub.s32 2, %v1709
    %v1711 = vrot.slane %v1070, %v1710
    %v1713 = vsel %vm220, %v1701, 0
    %v1716 = vsel %vm220, %v1702, 0
    %1718 = vmatprep.subr.mxu0 0.0
    %1719 = vmatpush1.msra.mxu0 %v1704
    %1720 = vmatprep.subr.mxu0 0.0
    %1721 = vmatpush1.msra.mxu0 %v1705
    %1722 = vmatprep.subr.mxu0 0.0
    %1723 = vmatpush1.msra.mxu0 %v1706
    %1724 = vmatprep.subr.mxu0 0.0
    %1725 = vmatpush1.msra.mxu0 %v1707
    %1726 = vmatprep.subr.mxu0 0.0
    %1727 = vmatpush1.msra.mxu0 0.0
    %1728 = vmatprep.subr.mxu0 0.0
    %1729 = vmatpush1.msra.mxu0 0.0
    %1730 = vmatprep.subr.mxu0 0.0
    %1731 = vmatpush1.msra.mxu0 0.0
    %1732 = vmatprep.subr.mxu0 0.0
    %1733 = vmatpush1.msra.mxu0 0.0
    %1734 = vmatprep.subr.mxu0 0.0
    %1735 = vmatpush1.msra.mxu0 0.0
    %1736 = vmatprep.subr.mxu0 0.0
    %1737 = vmatpush1.msra.mxu0 0.0
    %1738 = vmatprep.subr.mxu0 0.0
    %1739 = vmatpush1.msra.mxu0 0.0
    %1740 = vmatprep.subr.mxu0 0.0
    %1741 = vmatpush1.msra.mxu0 0.0
    %1742 = vmatprep.subr.mxu0 0.0
    %1743 = vmatpush1.msra.mxu0 0.0
    %1744 = vmatprep.subr.mxu0 0.0
    %1745 = vmatpush1.msra.mxu0 0.0
    %1746 = vmatprep.subr.mxu0 0.0
    %1747 = vmatpush1.msra.mxu0 0.0
    %1748 = vmatprep.subr.mxu0 0.0
    %1749 = vmatpush1.msra.mxu0 0.0
    %1750 = vmatprep.subr.mxu0 0.0
    %1751 = vmatpush1.msra.mxu0 0.0
    %1752 = vmatprep.subr.mxu0 0.0
    %1753 = vmatpush1.msra.mxu0 0.0
    %1754 = vmatprep.subr.mxu0 0.0
    %1755 = vmatpush1.msra.mxu0 0.0
    %1756 = vmatprep.subr.mxu0 0.0
    %1757 = vmatpush1.msra.mxu0 0.0
    %1758 = vmatprep.subr.mxu0 0.0
    %1759 = vmatpush1.msra.mxu0 0.0
    %1760 = vmatprep.subr.mxu0 0.0
    %1761 = vmatpush1.msra.mxu0 0.0
    %1762 = vmatprep.subr.mxu0 0.0
    %1763 = vmatpush1.msra.mxu0 0.0
    %1764 = vmatprep.subr.mxu0 0.0
    %1765 = vmatpush1.msra.mxu0 0.0
    %1766 = vmatprep.subr.mxu0 0.0
    %1767 = vmatpush1.msra.mxu0 0.0
    %1768 = vmatprep.subr.mxu0 0.0
    %1769 = vmatpush1.msra.mxu0 0.0
    %1770 = vmatprep.subr.mxu0 0.0
    %1771 = vmatpush1.msra.mxu0 0.0
    %1772 = vmatprep.subr.mxu0 0.0
    %1773 = vmatpush1.msra.mxu0 0.0
    %1774 = vmatprep.subr.mxu0 0.0
    %1775 = vmatpush1.msra.mxu0 0.0
    %1776 = vmatprep.subr.mxu0 0.0
    %1777 = vmatpush1.msra.mxu0 0.0
    %1778 = vmatprep.subr.mxu0 0.0
    %1779 = vmatpush1.msra.mxu0 0.0
    %1780 = vmatprep.subr.mxu0 0.0
    %1781 = vmatpush1.msra.mxu0 0.0
    %1782 = vmatprep.mubr.f32.mxu0 0.0
    %1783 = vmatmul.mubr.f32.gmra.mrb[0].mxu0 %v1713
    %v1784 = vpop.f32.mrb[0].mxu0
    %v1785 = vadd.f32 %v1711, %v1784
    %v1786 = vpop.f32.mrb[0].mxu0
    %1787 = vmatprep.mubr.f32.mxu0 0.0
    %1788 = vmatmul.mubr.f32.gmra.mrb[0].mxu0 %v1716
    %v1789 = vpop.f32.mrb[0].mxu0
    %v1790 = vadd.f32 %v1711, %v1789
    %v1791 = vpop.f32.mrb[0].mxu0
    %1792 = vdwg.mxu0
    %v1793 = vmax.f32 %v1785, 0.0
    %v1794 = vmax.f32 %v1790, 0.0
    %s1795 = scalar_lea.vmem %s5, 64
    %v1796 = vld [vmem:[%s1795] sm:$0xff]
    %v1797 = vld [vmem:[%s1795 + $0x8] sm:$0xff]
    %v1798 = vld [vmem:[%s1795 + $0x10] sm:$0xff]
    %v1799 = vld [vmem:[%s1795 + $0x18] sm:$0xff]
    %v1800 = vld [vmem:[%s1795 + $0x20] sm:$0xff]
    %v1801 = vld [vmem:[%s1795 + $0x28] sm:$0xff]
    %v1802 = vld [vmem:[%s1795 + $0x30] sm:$0xff]
    %v1803 = vld [vmem:[%s1795 + $0x38] sm:$0xff]
    %v1804 = vlaneseq
    %v1805 = vshrl.u32 %v1804, 7
    %v1806 = vsub.s32 3, %v1805
    %v1807 = vrot.slane %v1070, %v1806
    %v1809 = vsel %vm947, %v1793, 0
    %v1812 = vsel %vm947, %v1794, 0
    %1814 = vmatprep.subr.mxu0 0.0
    %1815 = vmatpush1.msra.mxu0 %v1796
    %1816 = vmatprep.subr.mxu0 0.0
    %1817 = vmatpush1.msra.mxu0 %v1797
    %1818 = vmatprep.subr.mxu0 0.0
    %1819 = vmatpush1.msra.mxu0 %v1798
    %1820 = vmatprep.subr.mxu0 0.0
    %1821 = vmatpush1.msra.mxu0 %v1799
    %1822 = vmatprep.subr.mxu0 0.0
    %1823 = vmatpush1.msra.mxu0 %v1800
    %1824 = vmatprep.subr.mxu0 0.0
    %1825 = vmatpush1.msra.mxu0 %v1801
    %1826 = vmatprep.subr.mxu0 0.0
    %1827 = vmatpush1.msra.mxu0 %v1802
    %1828 = vmatprep.subr.mxu0 0.0
    %1829 = vmatpush1.msra.mxu0 %v1803
    %1830 = vmatprep.subr.mxu0 0.0
    %1831 = vmatpush1.msra.mxu0 0.0
    %1832 = vmatprep.subr.mxu0 0.0
    %1833 = vmatpush1.msra.mxu0 0.0
    %1834 = vmatprep.subr.mxu0 0.0
    %1835 = vmatpush1.msra.mxu0 0.0
    %1836 = vmatprep.subr.mxu0 0.0
    %1837 = vmatpush1.msra.mxu0 0.0
    %1838 = vmatprep.subr.mxu0 0.0
    %1839 = vmatpush1.msra.mxu0 0.0
    %1840 = vmatprep.subr.mxu0 0.0
    %1841 = vmatpush1.msra.mxu0 0.0
    %1842 = vmatprep.subr.mxu0 0.0
    %1843 = vmatpush1.msra.mxu0 0.0
    %1844 = vmatprep.subr.mxu0 0.0
    %1845 = vmatpush1.msra.mxu0 0.0
    %1846 = vmatprep.subr.mxu0 0.0
    %1847 = vmatpush1.msra.mxu0 0.0
    %1848 = vmatprep.subr.mxu0 0.0
    %1849 = vmatpush1.msra.mxu0 0.0
    %1850 = vmatprep.subr.mxu0 0.0
    %1851 = vmatpush1.msra.mxu0 0.0
    %1852 = vmatprep.subr.mxu0 0.0
    %1853 = vmatpush1.msra.mxu0 0.0
    %1854 = vmatprep.subr.mxu0 0.0
    %1855 = vmatpush1.msra.mxu0 0.0
    %1856 = vmatprep.subr.mxu0 0.0
    %1857 = vmatpush1.msra.mxu0 0.0
    %1858 = vmatprep.subr.mxu0 0.0
    %1859 = vmatpush1.msra.mxu0 0.0
    %1860 = vmatprep.subr.mxu0 0.0
    %1861 = vmatpush1.msra.mxu0 0.0
    %1862 = vmatprep.subr.mxu0 0.0
    %1863 = vmatpush1.msra.mxu0 0.0
    %1864 = vmatprep.subr.mxu0 0.0
    %1865 = vmatpush1.msra.mxu0 0.0
    %1866 = vmatprep.subr.mxu0 0.0
    %1867 = vmatpush1.msra.mxu0 0.0
    %1868 = vmatprep.subr.mxu0 0.0
    %1869 = vmatpush1.msra.mxu0 0.0
    %1870 = vmatprep.subr.mxu0 0.0
    %1871 = vmatpush1.msra.mxu0 0.0
    %1872 = vmatprep.subr.mxu0 0.0
    %1873 = vmatpush1.msra.mxu0 0.0
    %1874 = vmatprep.subr.mxu0 0.0
    %1875 = vmatpush1.msra.mxu0 0.0
    %1876 = vmatprep.subr.mxu0 0.0
    %1877 = vmatpush1.msra.mxu0 0.0
    %1878 = vmatprep.mubr.f32.mxu0 0.0
    %1879 = vmatmul.mubr.f32.gmra.mrb[0].mxu0 %v1809
    %v1880 = vpop.f32.mrb[0].mxu0
    %v1881 = vadd.f32 %v1807, %v1880
    %v1882 = vpop.f32.mrb[0].mxu0
    %1883 = vmatprep.mubr.f32.mxu0 0.0
    %1884 = vmatmul.mubr.f32.gmra.mrb[0].mxu0 %v1812
    %v1885 = vpop.f32.mrb[0].mxu0
    %v1886 = vadd.f32 %v1807, %v1885
    %v1887 = vpop.f32.mrb[0].mxu0
    %1888 = vdwg.mxu0
    %v1889 = vadd.f32 %v1701, %v1881
    %v1890 = vadd.f32 %v1702, %v1886
    %v1891 = vsel %vm220, %v1889, 0.0
    %1892 = vadd.xlane.f32.xlu0 %v1891
    %v1893 = vpop.xlane.xlu0 %1892
    %v1894 = vsel %vm220, %v1890, 0.0
    %1895 = vadd.xlane.f32.xlu0 %v1894
    %v1896 = vpop.xlane.xlu0 %1895
    %v1897 = vmul.f32 %v1893, %v811
    %v1898 = vmul.f32 %v1896, %v811
    %v1899 = vsub.f32 %v1889, %v1897
    %v1900 = vsub.f32 %v1890, %v1898
    %v1901 = vmul.f32 %v1899, %v1899
    %v1902 = vmul.f32 %v1900, %v1900
    %v1903 = vsel %vm220, %v1901, 0.0
    %1904 = vadd.xlane.f32.xlu0 %v1903
    %v1905 = vpop.xlane.xlu0 %1904
    %v1906 = vsel %vm220, %v1902, 0.0
    %1907 = vadd.xlane.f32.xlu0 %v1906
    %v1908 = vpop.xlane.xlu0 %1907
    %v1909 = vmul.f32 %v1905, %v811
    %v1910 = vmul.f32 %v1908, %v811
    %v1911 = vadd.f32 %v1909, 1e-05
    %v1912 = vadd.f32 %v1910, 1e-05
    %v1913 = vrsqrt.pop %v1911
    %v1914 = vrsqrt.pop %v1912
    %v1915 = vmul.f32 %v1899, %v1913
    %v1916 = vmul.f32 %v1900, %v1914
    %v1917 = vlaneseq
    %v1918 = vshrl.u32 %v1917, 7
    %v1919 = vsub.s32 6, %v1918
    %v1920 = vrot.slane %v1070, %v1919
    %v1921 = vmul.f32 %v1915, %v1920
    %v1922 = vmul.f32 %v1916, %v1920
    %v1923 = vlaneseq
    %v1924 = vshrl.u32 %v1923, 7
    %v1925 = vsub.s32 7, %v1924
    %v1926 = vrot.slane %v1070, %v1925
    %v1927 = vadd.f32 %v1921, %v1926
    %v1928 = vadd.f32 %v1922, %v1926
    %1929 = vrot.lane.b32.xlu0 %v73, 32
    %v1930 = vpop.permute.xlu0 %1929
    %1931 = vrot.lane.b32.xlu0 %v74, 32
    %v1932 = vpop.permute.xlu0 %1931
    %v1935 = vsel %vm220, %v1927, %v1930
    %v1936 = vsel %vm220, %v1928, %v1932
    %v1937 = vld [vmem:[%s7] sm:$0xff]
    %v1938 = vld [vmem:[%s7 + $0x8] sm:$0xff]
    %v1939 = vld [vmem:[%s7 + $0x10] sm:$0xff]
    %v1940 = vld [vmem:[%s7 + $0x18] sm:$0xff]
    %v1941 = vld [vmem:[%s7 + $0x20] sm:$0xff]
    %v1942 = vld [vmem:[%s7 + $0x28] sm:$0xff]
    %v1943 = vlaneseq
    %v1944 = vshrl.u32 %v1943, 7
    %v1945 = vsub.s32 1, %v1944
    %v1946 = vrot.slane %v75, %v1945
    %vm1947 = vcmask 392192
    %v1949 = vsel %vm1947, %v1935, 0
    %v1952 = vsel %vm1947, %v1936, 0
    %1954 = vmatprep.subr.mxu0 0.0
    %1955 = vmatpush1.msra.mxu0 %v1937
    %1956 = vmatprep.subr.mxu0 0.0
    %1957 = vmatpush1.msra.mxu0 %v1938
    %1958 = vmatprep.subr.mxu0 0.0
    %1959 = vmatpush1.msra.mxu0 %v1939
    %1960 = vmatprep.subr.mxu0 0.0
    %1961 = vmatpush1.msra.mxu0 %v1940
    %1962 = vmatprep.subr.mxu0 0.0
    %1963 = vmatpush1.msra.mxu0 %v1941
    %1964 = vmatprep.subr.mxu0 0.0
    %1965 = vmatpush1.msra.mxu0 %v1942
    %1966 = vmatprep.subr.mxu0 0.0
    %1967 = vmatpush1.msra.mxu0 0.0
    %1968 = vmatprep.subr.mxu0 0.0
    %1969 = vmatpush1.msra.mxu0 0.0
    %1970 = vmatprep.subr.mxu0 0.0
    %1971 = vmatpush1.msra.mxu0 0.0
    %1972 = vmatprep.subr.mxu0 0.0
    %1973 = vmatpush1.msra.mxu0 0.0
    %1974 = vmatprep.subr.mxu0 0.0
    %1975 = vmatpush1.msra.mxu0 0.0
    %1976 = vmatprep.subr.mxu0 0.0
    %1977 = vmatpush1.msra.mxu0 0.0
    %1978 = vmatprep.subr.mxu0 0.0
    %1979 = vmatpush1.msra.mxu0 0.0
    %1980 = vmatprep.subr.mxu0 0.0
    %1981 = vmatpush1.msra.mxu0 0.0
    %1982 = vmatprep.subr.mxu0 0.0
    %1983 = vmatpush1.msra.mxu0 0.0
    %1984 = vmatprep.subr.mxu0 0.0
    %1985 = vmatpush1.msra.mxu0 0.0
    %1986 = vmatprep.subr.mxu0 0.0
    %1987 = vmatpush1.msra.mxu0 0.0
    %1988 = vmatprep.subr.mxu0 0.0
    %1989 = vmatpush1.msra.mxu0 0.0
    %1990 = vmatprep.subr.mxu0 0.0
    %1991 = vmatpush1.msra.mxu0 0.0
    %1992 = vmatprep.subr.mxu0 0.0
    %1993 = vmatpush1.msra.mxu0 0.0
    %1994 = vmatprep.subr.mxu0 0.0
    %1995 = vmatpush1.msra.mxu0 0.0
    %1996 = vmatprep.subr.mxu0 0.0
    %1997 = vmatpush1.msra.mxu0 0.0
    %1998 = vmatprep.subr.mxu0 0.0
    %1999 = vmatpush1.msra.mxu0 0.0
    %2000 = vmatprep.subr.mxu0 0.0
    %2001 = vmatpush1.msra.mxu0 0.0
    %2002 = vmatprep.subr.mxu0 0.0
    %2003 = vmatpush1.msra.mxu0 0.0
    %2004 = vmatprep.subr.mxu0 0.0
    %2005 = vmatpush1.msra.mxu0 0.0
    %2006 = vmatprep.subr.mxu0 0.0
    %2007 = vmatpush1.msra.mxu0 0.0
    %2008 = vmatprep.subr.mxu0 0.0
    %2009 = vmatpush1.msra.mxu0 0.0
    %2010 = vmatprep.subr.mxu0 0.0
    %2011 = vmatpush1.msra.mxu0 0.0
    %2012 = vmatprep.subr.mxu0 0.0
    %2013 = vmatpush1.msra.mxu0 0.0
    %2014 = vmatprep.subr.mxu0 0.0
    %2015 = vmatpush1.msra.mxu0 0.0
    %2016 = vmatprep.subr.mxu0 0.0
    %2017 = vmatpush1.msra.mxu0 0.0
    %2018 = vmatprep.mubr.f32.mxu0 0.0
    %2019 = vmatmul.mubr.f32.gmra.mrb[0].mxu0 %v1949
    %v2020 = vpop.f32.mrb[0].mxu0
    %v2021 = vadd.f32 %v1946, %v2020
    %v2022 = vpop.f32.mrb[0].mxu0
    %2023 = vmatprep.mubr.f32.mxu0 0.0
    %2024 = vmatmul.mubr.f32.gmra.mrb[0].mxu0 %v1952
    %v2025 = vpop.f32.mrb[0].mxu0
    %v2026 = vadd.f32 %v1946, %v2025
    %v2027 = vpop.f32.mrb[0].mxu0
    %2028 = vdwg.mxu0
    %v2029 = vtanh.pop %v2021
    %v2030 = vtanh.pop %v2026
    %vm2031 = vcmask 64512
    %2032 = vst.msk [vmem:[%s9] sm:$0xff] %vm2031, %v2029
    %2033 = vst.msk [vmem:[%s9 + $0x8] sm:$0xff] %vm2031, %v2030
    // Predicated region
    $region50: #{tpu_custom_call.1} parent=1 // pred_check
      _
    $region51: #{tpu_custom_call.1} parent=1 // pred_check_branch
      %2035 = sbr.rel (0) target = $region53
    $region52: #{tpu_custom_call.1} parent=1 // pred_region
      _
    $region53: #{tpu_custom_call.1} parent=1 // pred_fallthru
      _
    // Predicated region
    $region54: #{tpu_custom_call.1} parent=1 // pred_check
      _
    $region55: #{tpu_custom_call.1} parent=1 // pred_check_branch
      %2037 = sbr.rel (0) target = $region57
    $region56: #{tpu_custom_call.1} parent=1 // pred_region
      _
    $region57: #{tpu_custom_call.1} parent=1 // pred_fallthru
      _
    %2038 = vsyncpa [#allocation3], 1
    %2039 = vsyncpa [#allocation5], 1

</llo_original>
